<compile_context>
chip_gen: v7x
topology: tpu7x:2x2x1
jax: 0.10.0
libtpu: 0.0.40
codegen_flags: <defaults>
</compile_context>

<pallas_src>
import jax
import jax.numpy as jnp
from jax import lax
from jax.experimental import pallas as pl
from jax.experimental.pallas import tpu as pltpu


def _bilstm_mean_kernel(x_ref, wih_ref, whh_f_ref, whh_b_ref, b_ref,
                        out_ref, gf_ref, gb_ref):
    """x_ref: (Nt, TN, d) time-major batch tile. Gate order everywhere: i|f|o|g."""
    Nt, TN, d = x_ref.shape
    H = d // 2
    G = 4 * H  # per-direction gate width

    # ---- hoisted input projection: one big matmul for all time steps and both
    # directions, bias folded in (no per-step x@W / +b work). -----------------
    x2d = x_ref[...].reshape(Nt * TN, d)
    gin = (jnp.dot(x2d, wih_ref[...], preferred_element_type=jnp.float32)
           + b_ref[...])                              # (Nt*TN, 2G)
    gin = gin.reshape(Nt, TN, 2 * G)
    gf_ref[...] = gin[:, :, :G]                       # forward-direction gates
    gb_ref[...] = gin[:, :, G:]                       # backward-direction gates

    whh_f = whh_f_ref[...]                            # (H, G) hoisted out of loop
    whh_b = whh_b_ref[...]

    def cell(pre, h, c, whh):
        gates = pre + jnp.dot(h, whh, preferred_element_type=jnp.float32)
        sig = jax.nn.sigmoid(gates[:, :3 * H])        # i | f | o in one dispatch
        g = jnp.tanh(gates[:, 3 * H:])                # g in one dispatch
        i_g = sig[:, :H]
        f_g = sig[:, H:2 * H]
        o_g = sig[:, 2 * H:]
        c_new = f_g * c + i_g * g
        h_new = o_g * jnp.tanh(c_new)
        return h_new, c_new

    def step(t, carry):
        hf, cf, af, hb, cb, ab = carry
        # forward step t and backward step Nt-1-t are independent -> ILP.
        hf, cf = cell(gf_ref[t], hf, cf, whh_f)
        hb, cb = cell(gb_ref[Nt - 1 - t], hb, cb, whh_b)
        return hf, cf, af + hf, hb, cb, ab + hb

    zeros = jnp.zeros((TN, H), jnp.float32)
    carry = (zeros, zeros, zeros, zeros, zeros, zeros)
    _, _, acc_f, _, _, acc_b = lax.fori_loop(0, Nt, step, carry, unroll=True)

    # mean over time of concat(forward_h_t, backward_h_t) -> (TN, d)
    out = jnp.concatenate([acc_f, acc_b], axis=-1) * (1.0 / Nt)
    out_ref[...] = out.astype(out_ref.dtype)


def init_params(key, emb_dim):
    """Deterministic synthetic LSTM parameters, PyTorch layout & gate order (i,f,g,o)."""
    H = emb_dim // 2
    bound = 1.0 / (H ** 0.5)
    keys = jax.random.split(key, 8)

    def u(k_, shape):
        return jax.random.uniform(k_, shape, jnp.float32, -bound, bound)

    # b = b_ih + b_hh folded into a single (1, 4H) bias per direction.
    return dict(
        wih_f=u(keys[0], (emb_dim, 4 * H)), whh_f=u(keys[1], (H, 4 * H)),
        b_f=u(keys[2], (1, 4 * H)) + u(keys[3], (1, 4 * H)),
        wih_b=u(keys[4], (emb_dim, 4 * H)), whh_b=u(keys[5], (H, 4 * H)),
        b_b=u(keys[6], (1, 4 * H)) + u(keys[7], (1, 4 * H)),
    )


def prepare_params(params, emb_dim):
    """PyTorch layout (i,f,g,o) -> kernel layout: gate order (i,f,o,g), both
    directions' input weights / biases fused into one (d, 8H) / (1, 8H)."""
    H = emb_dim // 2

    def reorder(w):  # columns [i|f|g|o] -> [i|f|o|g]
        return jnp.concatenate([w[..., :2 * H], w[..., 3 * H:], w[..., 2 * H:3 * H]],
                               axis=-1)

    wih = jnp.concatenate([reorder(params['wih_f']), reorder(params['wih_b'])], axis=-1)
    b = jnp.concatenate([reorder(params['b_f']), reorder(params['b_b'])], axis=-1)
    return wih, reorder(params['whh_f']), reorder(params['whh_b']), b


def _pick_batch_tile(N):
    # A partial-N tile must be a multiple of 8 (sublane rule); full-N is always legal.
    for t in (128, 64, 32, 16, 8):
        if N % t == 0:
            return t
    return N


def neighbor_aggregation(embeds, params):
    """embeds: (N, Nt, d) -> (N, d), matching NeighborAggregation.forward."""
    N, Nt, d = embeds.shape
    assert d % 2 == 0, "emb_dim must be even (bidirectional hidden = d//2)"
    H = d // 2
    G = 4 * H

    wih, whh_f, whh_b, b = prepare_params(params, d)
    # TODO(synk): optionally cast x_t / weights to bf16 for 2x MXU throughput on
    # v6e/v7x; kept f32 here so the in-script exactness check stays tight.
    x_t = jnp.transpose(embeds, (1, 0, 2))            # (Nt, N, d) time-major

    TN = _pick_batch_tile(N)
    grid = (N // TN,)

    return pl.pallas_call(
        _bilstm_mean_kernel,
        out_shape=jax.ShapeDtypeStruct((N, d), embeds.dtype),
        grid_spec=pltpu.PrefetchScalarGridSpec(
            num_scalar_prefetch=0,
            grid=grid,
            in_specs=[
                pl.BlockSpec((Nt, TN, d), lambda n: (0, n, 0)),   # x tile
                pl.BlockSpec((d, 2 * G), lambda n: (0, 0)),       # fused W_ih
                pl.BlockSpec((H, G), lambda n: (0, 0)),           # W_hh forward
                pl.BlockSpec((H, G), lambda n: (0, 0)),           # W_hh backward
                pl.BlockSpec((1, 2 * G), lambda n: (0, 0)),       # fused bias
            ],
            out_specs=pl.BlockSpec((TN, d), lambda n: (n, 0)),
            scratch_shapes=[
                pltpu.VMEM((Nt, TN, G), jnp.float32),             # fwd gates
                pltpu.VMEM((Nt, TN, G), jnp.float32),             # bwd gates
            ],
        ),
        compiler_params=pltpu.CompilerParams(
            dimension_semantics=("parallel",),        # batch tiles independent (v7x 2 TCs)
            vmem_limit_bytes=32 * 1024 * 1024,        # safe on v5e / v6e / v7x
        ),
    )(x_t, wih, whh_f, whh_b, b)


def _reference(embeds, params):
    """Pure-JAX bidirectional LSTM + time-mean (PyTorch gate order), for checking."""
    N, Nt, d = embeds.shape
    H = d // 2

    def run(wih, whh, b, xs):
        def step(carry, xt):
            h, c = carry
            gates = xt @ wih + h @ whh + b
            i = jax.nn.sigmoid(gates[:, :H])
            f = jax.nn.sigmoid(gates[:, H:2 * H])
            g = jnp.tanh(gates[:, 2 * H:3 * H])
            o = jax.nn.sigmoid(gates[:, 3 * H:])
            c = f * c + i * g
            h = o * jnp.tanh(c)
            return (h, c), h

        zeros = jnp.zeros((N, H), jnp.float32)
        _, hs = lax.scan(step, (zeros, zeros), xs)
        return hs  # (Nt, N, H)

    xs = jnp.transpose(embeds, (1, 0, 2))
    hf = run(params['wih_f'], params['whh_f'], params['b_f'], xs)
    hb = run(params['wih_b'], params['whh_b'], params['b_b'], xs[::-1])[::-1]
    out = jnp.concatenate([hf, hb], axis=-1)  # (Nt, N, d)
    return jnp.mean(out, axis=0)              # (N, d)


if __name__ == "__main__":
    key = jax.random.PRNGKey(0)

    def check(N, Nt, d, k):
        k_x, k_p = jax.random.split(k)
        embeds = jax.random.normal(k_x, (N, Nt, d), jnp.float32)
        params = init_params(k_p, d)
        out = jax.block_until_ready(neighbor_aggregation(embeds, params))
        ref = jax.block_until_ready(_reference(embeds, params))
        assert out.shape == (N, d), out.shape
        err = float(jnp.max(jnp.abs(out - ref)))
        assert jnp.allclose(out, ref, atol=1e-4, rtol=1e-4), err

    k1, k2 = jax.random.split(key)
    check(2, 8, 32, k1)     # module's toy shape (N, Nt, d)
    check(256, 8, 32, k2)   # exercises the batch grid (2 parallel tiles of 128)
    print("KERNEL_OK")
</pallas_src>

<mosaic_0001>
module attributes {stable_mosaic.version = 11 : i64} {
  func.func @_bilstm_mean_kernel(%arg0: i32, %arg1: memref<8x2x32xf32, #tpu.memory_space<vmem>>, %arg2: memref<32x128xf32, #tpu.memory_space<vmem>>, %arg3: memref<16x64xf32, #tpu.memory_space<vmem>>, %arg4: memref<16x64xf32, #tpu.memory_space<vmem>>, %arg5: memref<1x128xf32, #tpu.memory_space<vmem>>, %arg6: memref<2x32xf32, #tpu.memory_space<vmem>>, %arg7: memref<8x2x64xf32, #tpu.memory_space<vmem>>, %arg8: memref<8x2x64xf32, #tpu.memory_space<vmem>>) attributes {dimension_semantics = [#tpu.dimension_semantics<parallel>], iteration_bounds = array<i64: 1>, scalar_prefetch = 0 : i64, scratch_operands = 2 : i64, tpu.core_type = #tpu.core_type<tc>, window_params = [{transform_indices = @transform_0, window_bounds = array<i64: 8, 2, 32>}, {pipeline_mode = #tpu.pipeline_mode<synchronous>, transform_indices = @transform_1, window_bounds = array<i64: 32, 128>}, {pipeline_mode = #tpu.pipeline_mode<synchronous>, transform_indices = @transform_2, window_bounds = array<i64: 16, 64>}, {pipeline_mode = #tpu.pipeline_mode<synchronous>, transform_indices = @transform_3, window_bounds = array<i64: 16, 64>}, {pipeline_mode = #tpu.pipeline_mode<synchronous>, transform_indices = @transform_4, window_bounds = array<i64: 1, 128>}, {transform_indices = @transform_5, window_bounds = array<i64: 2, 32>}]} {
    %c0 = arith.constant 0 : index
    %c0_0 = arith.constant 0 : index
    %c0_1 = arith.constant 0 : index
    %0 = vector.load %arg1[%c0, %c0_0, %c0_1] : memref<8x2x32xf32, #tpu.memory_space<vmem>>, vector<8x2x32xf32>
    %1 = vector.shape_cast %0 : vector<8x2x32xf32> to vector<16x32xf32>
    %c0_2 = arith.constant 0 : index
    %c0_3 = arith.constant 0 : index
    %2 = vector.load %arg2[%c0_2, %c0_3] : memref<32x128xf32, #tpu.memory_space<vmem>>, vector<32x128xf32>
    %cst = arith.constant dense<0.000000e+00> : vector<16x128xf32>
    %3 = tpu.matmul %1, %2, %cst {dimension_numbers = #tpu.dot_dimension_numbers<[1], [0], [0], [1], [0, 0, 1, 1], [], []>} : vector<16x32xf32>, vector<32x128xf32>, vector<16x128xf32> -> vector<16x128xf32>
    %c0_4 = arith.constant 0 : index
    %c0_5 = arith.constant 0 : index
    %4 = vector.load %arg5[%c0_4, %c0_5] : memref<1x128xf32, #tpu.memory_space<vmem>>, vector<1x128xf32>
    %5 = vector.broadcast %4 : vector<1x128xf32> to vector<16x128xf32>
    %6 = arith.addf %3, %5 : vector<16x128xf32>
    %7 = vector.shape_cast %6 : vector<16x128xf32> to vector<8x2x128xf32>
    %8 = vector.extract_strided_slice %7 {offsets = [0, 0, 0], sizes = [8, 2, 64], strides = [1, 1, 1]} : vector<8x2x128xf32> to vector<8x2x64xf32>
    %c0_6 = arith.constant 0 : index
    %c0_7 = arith.constant 0 : index
    %c0_8 = arith.constant 0 : index
    %9 = vector.load %arg7[%c0_6, %c0_7, %c0_8] : memref<8x2x64xf32, #tpu.memory_space<vmem>>, vector<8x2x64xf32>
    tpu.vector_store %arg7[%c0_6, %c0_7, %c0_8], %8 {strides = array<i32>} : memref<8x2x64xf32, #tpu.memory_space<vmem>>, vector<8x2x64xf32>,
    %10 = vector.extract_strided_slice %7 {offsets = [0, 0, 64], sizes = [8, 2, 64], strides = [1, 1, 1]} : vector<8x2x128xf32> to vector<8x2x64xf32>
    %c0_9 = arith.constant 0 : index
    %c0_10 = arith.constant 0 : index
    %c0_11 = arith.constant 0 : index
    %11 = vector.load %arg8[%c0_9, %c0_10, %c0_11] : memref<8x2x64xf32, #tpu.memory_space<vmem>>, vector<8x2x64xf32>
    tpu.vector_store %arg8[%c0_9, %c0_10, %c0_11], %10 {strides = array<i32>} : memref<8x2x64xf32, #tpu.memory_space<vmem>>, vector<8x2x64xf32>,
    %c0_12 = arith.constant 0 : index
    %c0_13 = arith.constant 0 : index
    %12 = vector.load %arg3[%c0_12, %c0_13] : memref<16x64xf32, #tpu.memory_space<vmem>>, vector<16x64xf32>
    %c0_14 = arith.constant 0 : index
    %c0_15 = arith.constant 0 : index
    %13 = vector.load %arg4[%c0_14, %c0_15] : memref<16x64xf32, #tpu.memory_space<vmem>>, vector<16x64xf32>
    %cst_16 = arith.constant 0.000000e+00 : f32
    %14 = vector.broadcast %cst_16 : f32 to vector<2x16xf32>
    %c0_i32 = arith.constant 0 : i32
    %15 = arith.index_cast %c0_i32 : i32 to index
    %c0_17 = arith.constant 0 : index
    %c0_18 = arith.constant 0 : index
    %16 = vector.load %arg7[%15, %c0_17, %c0_18] : memref<8x2x64xf32, #tpu.memory_space<vmem>>, vector<1x2x64xf32>
    %17 = vector.shape_cast %16 : vector<1x2x64xf32> to vector<2x64xf32>
    %cst_19 = arith.constant dense<0.000000e+00> : vector<2x64xf32>
    %18 = tpu.matmul %14, %12, %cst_19 {dimension_numbers = #tpu.dot_dimension_numbers<[1], [0], [0], [1], [0, 0, 1, 1], [], []>} : vector<2x16xf32>, vector<16x64xf32>, vector<2x64xf32> -> vector<2x64xf32>
    %19 = arith.addf %17, %18 : vector<2x64xf32>
    %20 = vector.extract_strided_slice %19 {offsets = [0, 0], sizes = [2, 48], strides = [1, 1]} : vector<2x64xf32> to vector<2x48xf32>
    %21 = arith.negf %20 : vector<2x48xf32>
    %22 = math.exp %21 : vector<2x48xf32>
    %cst_20 = arith.constant 1.000000e+00 : f32
    %23 = vector.broadcast %cst_20 : f32 to vector<2x48xf32>
    %24 = arith.addf %23, %22 : vector<2x48xf32>
    %25 = arith.divf %23, %24 : vector<2x48xf32>
    %26 = vector.extract_strided_slice %19 {offsets = [0, 48], sizes = [2, 16], strides = [1, 1]} : vector<2x64xf32> to vector<2x16xf32>
    %27 = math.tanh %26 : vector<2x16xf32>
    %28 = vector.extract_strided_slice %25 {offsets = [0, 0], sizes = [2, 16], strides = [1, 1]} : vector<2x48xf32> to vector<2x16xf32>
    %29 = vector.extract_strided_slice %25 {offsets = [0, 16], sizes = [2, 16], strides = [1, 1]} : vector<2x48xf32> to vector<2x16xf32>
    %30 = vector.extract_strided_slice %25 {offsets = [0, 32], sizes = [2, 16], strides = [1, 1]} : vector<2x48xf32> to vector<2x16xf32>
    %31 = arith.mulf %29, %14 : vector<2x16xf32>
    %32 = arith.mulf %28, %27 : vector<2x16xf32>
    %33 = arith.addf %31, %32 : vector<2x16xf32>
    %34 = math.tanh %33 : vector<2x16xf32>
    %35 = arith.mulf %30, %34 : vector<2x16xf32>
    %c7_i32 = arith.constant 7 : i32
    %36 = arith.subi %c7_i32, %c0_i32 : i32
    %37 = arith.index_cast %36 : i32 to index
    %c0_21 = arith.constant 0 : index
    %c0_22 = arith.constant 0 : index
    %38 = vector.load %arg8[%37, %c0_21, %c0_22] : memref<8x2x64xf32, #tpu.memory_space<vmem>>, vector<1x2x64xf32>
    %39 = vector.shape_cast %38 : vector<1x2x64xf32> to vector<2x64xf32>
    %cst_23 = arith.constant dense<0.000000e+00> : vector<2x64xf32>
    %40 = tpu.matmul %14, %13, %cst_23 {dimension_numbers = #tpu.dot_dimension_numbers<[1], [0], [0], [1], [0, 0, 1, 1], [], []>} : vector<2x16xf32>, vector<16x64xf32>, vector<2x64xf32> -> vector<2x64xf32>
    %41 = arith.addf %39, %40 : vector<2x64xf32>
    %42 = vector.extract_strided_slice %41 {offsets = [0, 0], sizes = [2, 48], strides = [1, 1]} : vector<2x64xf32> to vector<2x48xf32>
    %43 = arith.negf %42 : vector<2x48xf32>
    %44 = math.exp %43 : vector<2x48xf32>
    %cst_24 = arith.constant 1.000000e+00 : f32
    %45 = vector.broadcast %cst_24 : f32 to vector<2x48xf32>
    %46 = arith.addf %45, %44 : vector<2x48xf32>
    %47 = arith.divf %45, %46 : vector<2x48xf32>
    %48 = vector.extract_strided_slice %41 {offsets = [0, 48], sizes = [2, 16], strides = [1, 1]} : vector<2x64xf32> to vector<2x16xf32>
    %49 = math.tanh %48 : vector<2x16xf32>
    %50 = vector.extract_strided_slice %47 {offsets = [0, 0], sizes = [2, 16], strides = [1, 1]} : vector<2x48xf32> to vector<2x16xf32>
    %51 = vector.extract_strided_slice %47 {offsets = [0, 16], sizes = [2, 16], strides = [1, 1]} : vector<2x48xf32> to vector<2x16xf32>
    %52 = vector.extract_strided_slice %47 {offsets = [0, 32], sizes = [2, 16], strides = [1, 1]} : vector<2x48xf32> to vector<2x16xf32>
    %53 = arith.mulf %51, %14 : vector<2x16xf32>
    %54 = arith.mulf %50, %49 : vector<2x16xf32>
    %55 = arith.addf %53, %54 : vector<2x16xf32>
    %56 = math.tanh %55 : vector<2x16xf32>
    %57 = arith.mulf %52, %56 : vector<2x16xf32>
    %58 = arith.addf %14, %35 : vector<2x16xf32>
    %59 = arith.addf %14, %57 : vector<2x16xf32>
    %c1_i32 = arith.constant 1 : i32
    %60 = arith.index_cast %c1_i32 : i32 to index
    %c0_25 = arith.constant 0 : index
    %c0_26 = arith.constant 0 : index
    %61 = vector.load %arg7[%60, %c0_25, %c0_26] : memref<8x2x64xf32, #tpu.memory_space<vmem>>, vector<1x2x64xf32>
    %62 = vector.shape_cast %61 : vector<1x2x64xf32> to vector<2x64xf32>
    %cst_27 = arith.constant dense<0.000000e+00> : vector<2x64xf32>
    %63 = tpu.matmul %35, %12, %cst_27 {dimension_numbers = #tpu.dot_dimension_numbers<[1], [0], [0], [1], [0, 0, 1, 1], [], []>} : vector<2x16xf32>, vector<16x64xf32>, vector<2x64xf32> -> vector<2x64xf32>
    %64 = arith.addf %62, %63 : vector<2x64xf32>
    %65 = vector.extract_strided_slice %64 {offsets = [0, 0], sizes = [2, 48], strides = [1, 1]} : vector<2x64xf32> to vector<2x48xf32>
    %66 = arith.negf %65 : vector<2x48xf32>
    %67 = math.exp %66 : vector<2x48xf32>
    %cst_28 = arith.constant 1.000000e+00 : f32
    %68 = vector.broadcast %cst_28 : f32 to vector<2x48xf32>
    %69 = arith.addf %68, %67 : vector<2x48xf32>
    %70 = arith.divf %68, %69 : vector<2x48xf32>
    %71 = vector.extract_strided_slice %64 {offsets = [0, 48], sizes = [2, 16], strides = [1, 1]} : vector<2x64xf32> to vector<2x16xf32>
    %72 = math.tanh %71 : vector<2x16xf32>
    %73 = vector.extract_strided_slice %70 {offsets = [0, 0], sizes = [2, 16], strides = [1, 1]} : vector<2x48xf32> to vector<2x16xf32>
    %74 = vector.extract_strided_slice %70 {offsets = [0, 16], sizes = [2, 16], strides = [1, 1]} : vector<2x48xf32> to vector<2x16xf32>
    %75 = vector.extract_strided_slice %70 {offsets = [0, 32], sizes = [2, 16], strides = [1, 1]} : vector<2x48xf32> to vector<2x16xf32>
    %76 = arith.mulf %74, %33 : vector<2x16xf32>
    %77 = arith.mulf %73, %72 : vector<2x16xf32>
    %78 = arith.addf %76, %77 : vector<2x16xf32>
    %79 = math.tanh %78 : vector<2x16xf32>
    %80 = arith.mulf %75, %79 : vector<2x16xf32>
    %c7_i32_29 = arith.constant 7 : i32
    %81 = arith.subi %c7_i32_29, %c1_i32 : i32
    %82 = arith.index_cast %81 : i32 to index
    %c0_30 = arith.constant 0 : index
    %c0_31 = arith.constant 0 : index
    %83 = vector.load %arg8[%82, %c0_30, %c0_31] : memref<8x2x64xf32, #tpu.memory_space<vmem>>, vector<1x2x64xf32>
    %84 = vector.shape_cast %83 : vector<1x2x64xf32> to vector<2x64xf32>
    %cst_32 = arith.constant dense<0.000000e+00> : vector<2x64xf32>
    %85 = tpu.matmul %57, %13, %cst_32 {dimension_numbers = #tpu.dot_dimension_numbers<[1], [0], [0], [1], [0, 0, 1, 1], [], []>} : vector<2x16xf32>, vector<16x64xf32>, vector<2x64xf32> -> vector<2x64xf32>
    %86 = arith.addf %84, %85 : vector<2x64xf32>
    %87 = vector.extract_strided_slice %86 {offsets = [0, 0], sizes = [2, 48], strides = [1, 1]} : vector<2x64xf32> to vector<2x48xf32>
    %88 = arith.negf %87 : vector<2x48xf32>
    %89 = math.exp %88 : vector<2x48xf32>
    %cst_33 = arith.constant 1.000000e+00 : f32
    %90 = vector.broadcast %cst_33 : f32 to vector<2x48xf32>
    %91 = arith.addf %90, %89 : vector<2x48xf32>
    %92 = arith.divf %90, %91 : vector<2x48xf32>
    %93 = vector.extract_strided_slice %86 {offsets = [0, 48], sizes = [2, 16], strides = [1, 1]} : vector<2x64xf32> to vector<2x16xf32>
    %94 = math.tanh %93 : vector<2x16xf32>
    %95 = vector.extract_strided_slice %92 {offsets = [0, 0], sizes = [2, 16], strides = [1, 1]} : vector<2x48xf32> to vector<2x16xf32>
    %96 = vector.extract_strided_slice %92 {offsets = [0, 16], sizes = [2, 16], strides = [1, 1]} : vector<2x48xf32> to vector<2x16xf32>
    %97 = vector.extract_strided_slice %92 {offsets = [0, 32], sizes = [2, 16], strides = [1, 1]} : vector<2x48xf32> to vector<2x16xf32>
    %98 = arith.mulf %96, %55 : vector<2x16xf32>
    %99 = arith.mulf %95, %94 : vector<2x16xf32>
    %100 = arith.addf %98, %99 : vector<2x16xf32>
    %101 = math.tanh %100 : vector<2x16xf32>
    %102 = arith.mulf %97, %101 : vector<2x16xf32>
    %103 = arith.addf %58, %80 : vector<2x16xf32>
    %104 = arith.addf %59, %102 : vector<2x16xf32>
    %c2_i32 = arith.constant 2 : i32
    %105 = arith.index_cast %c2_i32 : i32 to index
    %c0_34 = arith.constant 0 : index
    %c0_35 = arith.constant 0 : index
    %106 = vector.load %arg7[%105, %c0_34, %c0_35] : memref<8x2x64xf32, #tpu.memory_space<vmem>>, vector<1x2x64xf32>
    %107 = vector.shape_cast %106 : vector<1x2x64xf32> to vector<2x64xf32>
    %cst_36 = arith.constant dense<0.000000e+00> : vector<2x64xf32>
    %108 = tpu.matmul %80, %12, %cst_36 {dimension_numbers = #tpu.dot_dimension_numbers<[1], [0], [0], [1], [0, 0, 1, 1], [], []>} : vector<2x16xf32>, vector<16x64xf32>, vector<2x64xf32> -> vector<2x64xf32>
    %109 = arith.addf %107, %108 : vector<2x64xf32>
    %110 = vector.extract_strided_slice %109 {offsets = [0, 0], sizes = [2, 48], strides = [1, 1]} : vector<2x64xf32> to vector<2x48xf32>
    %111 = arith.negf %110 : vector<2x48xf32>
    %112 = math.exp %111 : vector<2x48xf32>
    %cst_37 = arith.constant 1.000000e+00 : f32
    %113 = vector.broadcast %cst_37 : f32 to vector<2x48xf32>
    %114 = arith.addf %113, %112 : vector<2x48xf32>
    %115 = arith.divf %113, %114 : vector<2x48xf32>
    %116 = vector.extract_strided_slice %109 {offsets = [0, 48], sizes = [2, 16], strides = [1, 1]} : vector<2x64xf32> to vector<2x16xf32>
    %117 = math.tanh %116 : vector<2x16xf32>
    %118 = vector.extract_strided_slice %115 {offsets = [0, 0], sizes = [2, 16], strides = [1, 1]} : vector<2x48xf32> to vector<2x16xf32>
    %119 = vector.extract_strided_slice %115 {offsets = [0, 16], sizes = [2, 16], strides = [1, 1]} : vector<2x48xf32> to vector<2x16xf32>
    %120 = vector.extract_strided_slice %115 {offsets = [0, 32], sizes = [2, 16], strides = [1, 1]} : vector<2x48xf32> to vector<2x16xf32>
    %121 = arith.mulf %119, %78 : vector<2x16xf32>
    %122 = arith.mulf %118, %117 : vector<2x16xf32>
    %123 = arith.addf %121, %122 : vector<2x16xf32>
    %124 = math.tanh %123 : vector<2x16xf32>
    %125 = arith.mulf %120, %124 : vector<2x16xf32>
    %c7_i32_38 = arith.constant 7 : i32
    %126 = arith.subi %c7_i32_38, %c2_i32 : i32
    %127 = arith.index_cast %126 : i32 to index
    %c0_39 = arith.constant 0 : index
    %c0_40 = arith.constant 0 : index
    %128 = vector.load %arg8[%127, %c0_39, %c0_40] : memref<8x2x64xf32, #tpu.memory_space<vmem>>, vector<1x2x64xf32>
    %129 = vector.shape_cast %128 : vector<1x2x64xf32> to vector<2x64xf32>
    %cst_41 = arith.constant dense<0.000000e+00> : vector<2x64xf32>
    %130 = tpu.matmul %102, %13, %cst_41 {dimension_numbers = #tpu.dot_dimension_numbers<[1], [0], [0], [1], [0, 0, 1, 1], [], []>} : vector<2x16xf32>, vector<16x64xf32>, vector<2x64xf32> -> vector<2x64xf32>
    %131 = arith.addf %129, %130 : vector<2x64xf32>
    %132 = vector.extract_strided_slice %131 {offsets = [0, 0], sizes = [2, 48], strides = [1, 1]} : vector<2x64xf32> to vector<2x48xf32>
    %133 = arith.negf %132 : vector<2x48xf32>
    %134 = math.exp %133 : vector<2x48xf32>
    %cst_42 = arith.constant 1.000000e+00 : f32
    %135 = vector.broadcast %cst_42 : f32 to vector<2x48xf32>
    %136 = arith.addf %135, %134 : vector<2x48xf32>
    %137 = arith.divf %135, %136 : vector<2x48xf32>
    %138 = vector.extract_strided_slice %131 {offsets = [0, 48], sizes = [2, 16], strides = [1, 1]} : vector<2x64xf32> to vector<2x16xf32>
    %139 = math.tanh %138 : vector<2x16xf32>
    %140 = vector.extract_strided_slice %137 {offsets = [0, 0], sizes = [2, 16], strides = [1, 1]} : vector<2x48xf32> to vector<2x16xf32>
    %141 = vector.extract_strided_slice %137 {offsets = [0, 16], sizes = [2, 16], strides = [1, 1]} : vector<2x48xf32> to vector<2x16xf32>
    %142 = vector.extract_strided_slice %137 {offsets = [0, 32], sizes = [2, 16], strides = [1, 1]} : vector<2x48xf32> to vector<2x16xf32>
    %143 = arith.mulf %141, %100 : vector<2x16xf32>
    %144 = arith.mulf %140, %139 : vector<2x16xf32>
    %145 = arith.addf %143, %144 : vector<2x16xf32>
    %146 = math.tanh %145 : vector<2x16xf32>
    %147 = arith.mulf %142, %146 : vector<2x16xf32>
    %148 = arith.addf %103, %125 : vector<2x16xf32>
    %149 = arith.addf %104, %147 : vector<2x16xf32>
    %c3_i32 = arith.constant 3 : i32
    %150 = arith.index_cast %c3_i32 : i32 to index
    %c0_43 = arith.constant 0 : index
    %c0_44 = arith.constant 0 : index
    %151 = vector.load %arg7[%150, %c0_43, %c0_44] : memref<8x2x64xf32, #tpu.memory_space<vmem>>, vector<1x2x64xf32>
    %152 = vector.shape_cast %151 : vector<1x2x64xf32> to vector<2x64xf32>
    %cst_45 = arith.constant dense<0.000000e+00> : vector<2x64xf32>
    %153 = tpu.matmul %125, %12, %cst_45 {dimension_numbers = #tpu.dot_dimension_numbers<[1], [0], [0], [1], [0, 0, 1, 1], [], []>} : vector<2x16xf32>, vector<16x64xf32>, vector<2x64xf32> -> vector<2x64xf32>
    %154 = arith.addf %152, %153 : vector<2x64xf32>
    %155 = vector.extract_strided_slice %154 {offsets = [0, 0], sizes = [2, 48], strides = [1, 1]} : vector<2x64xf32> to vector<2x48xf32>
    %156 = arith.negf %155 : vector<2x48xf32>
    %157 = math.exp %156 : vector<2x48xf32>
    %cst_46 = arith.constant 1.000000e+00 : f32
    %158 = vector.broadcast %cst_46 : f32 to vector<2x48xf32>
    %159 = arith.addf %158, %157 : vector<2x48xf32>
    %160 = arith.divf %158, %159 : vector<2x48xf32>
    %161 = vector.extract_strided_slice %154 {offsets = [0, 48], sizes = [2, 16], strides = [1, 1]} : vector<2x64xf32> to vector<2x16xf32>
    %162 = math.tanh %161 : vector<2x16xf32>
    %163 = vector.extract_strided_slice %160 {offsets = [0, 0], sizes = [2, 16], strides = [1, 1]} : vector<2x48xf32> to vector<2x16xf32>
    %164 = vector.extract_strided_slice %160 {offsets = [0, 16], sizes = [2, 16], strides = [1, 1]} : vector<2x48xf32> to vector<2x16xf32>
    %165 = vector.extract_strided_slice %160 {offsets = [0, 32], sizes = [2, 16], strides = [1, 1]} : vector<2x48xf32> to vector<2x16xf32>
    %166 = arith.mulf %164, %123 : vector<2x16xf32>
    %167 = arith.mulf %163, %162 : vector<2x16xf32>
    %168 = arith.addf %166, %167 : vector<2x16xf32>
    %169 = math.tanh %168 : vector<2x16xf32>
    %170 = arith.mulf %165, %169 : vector<2x16xf32>
    %c7_i32_47 = arith.constant 7 : i32
    %171 = arith.subi %c7_i32_47, %c3_i32 : i32
    %172 = arith.index_cast %171 : i32 to index
    %c0_48 = arith.constant 0 : index
    %c0_49 = arith.constant 0 : index
    %173 = vector.load %arg8[%172, %c0_48, %c0_49] : memref<8x2x64xf32, #tpu.memory_space<vmem>>, vector<1x2x64xf32>
    %174 = vector.shape_cast %173 : vector<1x2x64xf32> to vector<2x64xf32>
    %cst_50 = arith.constant dense<0.000000e+00> : vector<2x64xf32>
    %175 = tpu.matmul %147, %13, %cst_50 {dimension_numbers = #tpu.dot_dimension_numbers<[1], [0], [0], [1], [0, 0, 1, 1], [], []>} : vector<2x16xf32>, vector<16x64xf32>, vector<2x64xf32> -> vector<2x64xf32>
    %176 = arith.addf %174, %175 : vector<2x64xf32>
    %177 = vector.extract_strided_slice %176 {offsets = [0, 0], sizes = [2, 48], strides = [1, 1]} : vector<2x64xf32> to vector<2x48xf32>
    %178 = arith.negf %177 : vector<2x48xf32>
    %179 = math.exp %178 : vector<2x48xf32>
    %cst_51 = arith.constant 1.000000e+00 : f32
    %180 = vector.broadcast %cst_51 : f32 to vector<2x48xf32>
    %181 = arith.addf %180, %179 : vector<2x48xf32>
    %182 = arith.divf %180, %181 : vector<2x48xf32>
    %183 = vector.extract_strided_slice %176 {offsets = [0, 48], sizes = [2, 16], strides = [1, 1]} : vector<2x64xf32> to vector<2x16xf32>
    %184 = math.tanh %183 : vector<2x16xf32>
    %185 = vector.extract_strided_slice %182 {offsets = [0, 0], sizes = [2, 16], strides = [1, 1]} : vector<2x48xf32> to vector<2x16xf32>
    %186 = vector.extract_strided_slice %182 {offsets = [0, 16], sizes = [2, 16], strides = [1, 1]} : vector<2x48xf32> to vector<2x16xf32>
    %187 = vector.extract_strided_slice %182 {offsets = [0, 32], sizes = [2, 16], strides = [1, 1]} : vector<2x48xf32> to vector<2x16xf32>
    %188 = arith.mulf %186, %145 : vector<2x16xf32>
    %189 = arith.mulf %185, %184 : vector<2x16xf32>
    %190 = arith.addf %188, %189 : vector<2x16xf32>
    %191 = math.tanh %190 : vector<2x16xf32>
    %192 = arith.mulf %187, %191 : vector<2x16xf32>
    %193 = arith.addf %148, %170 : vector<2x16xf32>
    %194 = arith.addf %149, %192 : vector<2x16xf32>
    %c4_i32 = arith.constant 4 : i32
    %195 = arith.index_cast %c4_i32 : i32 to index
    %c0_52 = arith.constant 0 : index
    %c0_53 = arith.constant 0 : index
    %196 = vector.load %arg7[%195, %c0_52, %c0_53] : memref<8x2x64xf32, #tpu.memory_space<vmem>>, vector<1x2x64xf32>
    %197 = vector.shape_cast %196 : vector<1x2x64xf32> to vector<2x64xf32>
    %cst_54 = arith.constant dense<0.000000e+00> : vector<2x64xf32>
    %198 = tpu.matmul %170, %12, %cst_54 {dimension_numbers = #tpu.dot_dimension_numbers<[1], [0], [0], [1], [0, 0, 1, 1], [], []>} : vector<2x16xf32>, vector<16x64xf32>, vector<2x64xf32> -> vector<2x64xf32>
    %199 = arith.addf %197, %198 : vector<2x64xf32>
    %200 = vector.extract_strided_slice %199 {offsets = [0, 0], sizes = [2, 48], strides = [1, 1]} : vector<2x64xf32> to vector<2x48xf32>
    %201 = arith.negf %200 : vector<2x48xf32>
    %202 = math.exp %201 : vector<2x48xf32>
    %cst_55 = arith.constant 1.000000e+00 : f32
    %203 = vector.broadcast %cst_55 : f32 to vector<2x48xf32>
    %204 = arith.addf %203, %202 : vector<2x48xf32>
    %205 = arith.divf %203, %204 : vector<2x48xf32>
    %206 = vector.extract_strided_slice %199 {offsets = [0, 48], sizes = [2, 16], strides = [1, 1]} : vector<2x64xf32> to vector<2x16xf32>
    %207 = math.tanh %206 : vector<2x16xf32>
    %208 = vector.extract_strided_slice %205 {offsets = [0, 0], sizes = [2, 16], strides = [1, 1]} : vector<2x48xf32> to vector<2x16xf32>
    %209 = vector.extract_strided_slice %205 {offsets = [0, 16], sizes = [2, 16], strides = [1, 1]} : vector<2x48xf32> to vector<2x16xf32>
    %210 = vector.extract_strided_slice %205 {offsets = [0, 32], sizes = [2, 16], strides = [1, 1]} : vector<2x48xf32> to vector<2x16xf32>
    %211 = arith.mulf %209, %168 : vector<2x16xf32>
    %212 = arith.mulf %208, %207 : vector<2x16xf32>
    %213 = arith.addf %211, %212 : vector<2x16xf32>
    %214 = math.tanh %213 : vector<2x16xf32>
    %215 = arith.mulf %210, %214 : vector<2x16xf32>
    %c7_i32_56 = arith.constant 7 : i32
    %216 = arith.subi %c7_i32_56, %c4_i32 : i32
    %217 = arith.index_cast %216 : i32 to index
    %c0_57 = arith.constant 0 : index
    %c0_58 = arith.constant 0 : index
    %218 = vector.load %arg8[%217, %c0_57, %c0_58] : memref<8x2x64xf32, #tpu.memory_space<vmem>>, vector<1x2x64xf32>
    %219 = vector.shape_cast %218 : vector<1x2x64xf32> to vector<2x64xf32>
    %cst_59 = arith.constant dense<0.000000e+00> : vector<2x64xf32>
    %220 = tpu.matmul %192, %13, %cst_59 {dimension_numbers = #tpu.dot_dimension_numbers<[1], [0], [0], [1], [0, 0, 1, 1], [], []>} : vector<2x16xf32>, vector<16x64xf32>, vector<2x64xf32> -> vector<2x64xf32>
    %221 = arith.addf %219, %220 : vector<2x64xf32>
    %222 = vector.extract_strided_slice %221 {offsets = [0, 0], sizes = [2, 48], strides = [1, 1]} : vector<2x64xf32> to vector<2x48xf32>
    %223 = arith.negf %222 : vector<2x48xf32>
    %224 = math.exp %223 : vector<2x48xf32>
    %cst_60 = arith.constant 1.000000e+00 : f32
    %225 = vector.broadcast %cst_60 : f32 to vector<2x48xf32>
    %226 = arith.addf %225, %224 : vector<2x48xf32>
    %227 = arith.divf %225, %226 : vector<2x48xf32>
    %228 = vector.extract_strided_slice %221 {offsets = [0, 48], sizes = [2, 16], strides = [1, 1]} : vector<2x64xf32> to vector<2x16xf32>
    %229 = math.tanh %228 : vector<2x16xf32>
    %230 = vector.extract_strided_slice %227 {offsets = [0, 0], sizes = [2, 16], strides = [1, 1]} : vector<2x48xf32> to vector<2x16xf32>
    %231 = vector.extract_strided_slice %227 {offsets = [0, 16], sizes = [2, 16], strides = [1, 1]} : vector<2x48xf32> to vector<2x16xf32>
    %232 = vector.extract_strided_slice %227 {offsets = [0, 32], sizes = [2, 16], strides = [1, 1]} : vector<2x48xf32> to vector<2x16xf32>
    %233 = arith.mulf %231, %190 : vector<2x16xf32>
    %234 = arith.mulf %230, %229 : vector<2x16xf32>
    %235 = arith.addf %233, %234 : vector<2x16xf32>
    %236 = math.tanh %235 : vector<2x16xf32>
    %237 = arith.mulf %232, %236 : vector<2x16xf32>
    %238 = arith.addf %193, %215 : vector<2x16xf32>
    %239 = arith.addf %194, %237 : vector<2x16xf32>
    %c5_i32 = arith.constant 5 : i32
    %240 = arith.index_cast %c5_i32 : i32 to index
    %c0_61 = arith.constant 0 : index
    %c0_62 = arith.constant 0 : index
    %241 = vector.load %arg7[%240, %c0_61, %c0_62] : memref<8x2x64xf32, #tpu.memory_space<vmem>>, vector<1x2x64xf32>
    %242 = vector.shape_cast %241 : vector<1x2x64xf32> to vector<2x64xf32>
    %cst_63 = arith.constant dense<0.000000e+00> : vector<2x64xf32>
    %243 = tpu.matmul %215, %12, %cst_63 {dimension_numbers = #tpu.dot_dimension_numbers<[1], [0], [0], [1], [0, 0, 1, 1], [], []>} : vector<2x16xf32>, vector<16x64xf32>, vector<2x64xf32> -> vector<2x64xf32>
    %244 = arith.addf %242, %243 : vector<2x64xf32>
    %245 = vector.extract_strided_slice %244 {offsets = [0, 0], sizes = [2, 48], strides = [1, 1]} : vector<2x64xf32> to vector<2x48xf32>
    %246 = arith.negf %245 : vector<2x48xf32>
    %247 = math.exp %246 : vector<2x48xf32>
    %cst_64 = arith.constant 1.000000e+00 : f32
    %248 = vector.broadcast %cst_64 : f32 to vector<2x48xf32>
    %249 = arith.addf %248, %247 : vector<2x48xf32>
    %250 = arith.divf %248, %249 : vector<2x48xf32>
    %251 = vector.extract_strided_slice %244 {offsets = [0, 48], sizes = [2, 16], strides = [1, 1]} : vector<2x64xf32> to vector<2x16xf32>
    %252 = math.tanh %251 : vector<2x16xf32>
    %253 = vector.extract_strided_slice %250 {offsets = [0, 0], sizes = [2, 16], strides = [1, 1]} : vector<2x48xf32> to vector<2x16xf32>
    %254 = vector.extract_strided_slice %250 {offsets = [0, 16], sizes = [2, 16], strides = [1, 1]} : vector<2x48xf32> to vector<2x16xf32>
    %255 = vector.extract_strided_slice %250 {offsets = [0, 32], sizes = [2, 16], strides = [1, 1]} : vector<2x48xf32> to vector<2x16xf32>
    %256 = arith.mulf %254, %213 : vector<2x16xf32>
    %257 = arith.mulf %253, %252 : vector<2x16xf32>
    %258 = arith.addf %256, %257 : vector<2x16xf32>
    %259 = math.tanh %258 : vector<2x16xf32>
    %260 = arith.mulf %255, %259 : vector<2x16xf32>
    %c7_i32_65 = arith.constant 7 : i32
    %261 = arith.subi %c7_i32_65, %c5_i32 : i32
    %262 = arith.index_cast %261 : i32 to index
    %c0_66 = arith.constant 0 : index
    %c0_67 = arith.constant 0 : index
    %263 = vector.load %arg8[%262, %c0_66, %c0_67] : memref<8x2x64xf32, #tpu.memory_space<vmem>>, vector<1x2x64xf32>
    %264 = vector.shape_cast %263 : vector<1x2x64xf32> to vector<2x64xf32>
    %cst_68 = arith.constant dense<0.000000e+00> : vector<2x64xf32>
    %265 = tpu.matmul %237, %13, %cst_68 {dimension_numbers = #tpu.dot_dimension_numbers<[1], [0], [0], [1], [0, 0, 1, 1], [], []>} : vector<2x16xf32>, vector<16x64xf32>, vector<2x64xf32> -> vector<2x64xf32>
    %266 = arith.addf %264, %265 : vector<2x64xf32>
    %267 = vector.extract_strided_slice %266 {offsets = [0, 0], sizes = [2, 48], strides = [1, 1]} : vector<2x64xf32> to vector<2x48xf32>
    %268 = arith.negf %267 : vector<2x48xf32>
    %269 = math.exp %268 : vector<2x48xf32>
    %cst_69 = arith.constant 1.000000e+00 : f32
    %270 = vector.broadcast %cst_69 : f32 to vector<2x48xf32>
    %271 = arith.addf %270, %269 : vector<2x48xf32>
    %272 = arith.divf %270, %271 : vector<2x48xf32>
    %273 = vector.extract_strided_slice %266 {offsets = [0, 48], sizes = [2, 16], strides = [1, 1]} : vector<2x64xf32> to vector<2x16xf32>
    %274 = math.tanh %273 : vector<2x16xf32>
    %275 = vector.extract_strided_slice %272 {offsets = [0, 0], sizes = [2, 16], strides = [1, 1]} : vector<2x48xf32> to vector<2x16xf32>
    %276 = vector.extract_strided_slice %272 {offsets = [0, 16], sizes = [2, 16], strides = [1, 1]} : vector<2x48xf32> to vector<2x16xf32>
    %277 = vector.extract_strided_slice %272 {offsets = [0, 32], sizes = [2, 16], strides = [1, 1]} : vector<2x48xf32> to vector<2x16xf32>
    %278 = arith.mulf %276, %235 : vector<2x16xf32>
    %279 = arith.mulf %275, %274 : vector<2x16xf32>
    %280 = arith.addf %278, %279 : vector<2x16xf32>
    %281 = math.tanh %280 : vector<2x16xf32>
    %282 = arith.mulf %277, %281 : vector<2x16xf32>
    %283 = arith.addf %238, %260 : vector<2x16xf32>
    %284 = arith.addf %239, %282 : vector<2x16xf32>
    %c6_i32 = arith.constant 6 : i32
    %285 = arith.index_cast %c6_i32 : i32 to index
    %c0_70 = arith.constant 0 : index
    %c0_71 = arith.constant 0 : index
    %286 = vector.load %arg7[%285, %c0_70, %c0_71] : memref<8x2x64xf32, #tpu.memory_space<vmem>>, vector<1x2x64xf32>
    %287 = vector.shape_cast %286 : vector<1x2x64xf32> to vector<2x64xf32>
    %cst_72 = arith.constant dense<0.000000e+00> : vector<2x64xf32>
    %288 = tpu.matmul %260, %12, %cst_72 {dimension_numbers = #tpu.dot_dimension_numbers<[1], [0], [0], [1], [0, 0, 1, 1], [], []>} : vector<2x16xf32>, vector<16x64xf32>, vector<2x64xf32> -> vector<2x64xf32>
    %289 = arith.addf %287, %288 : vector<2x64xf32>
    %290 = vector.extract_strided_slice %289 {offsets = [0, 0], sizes = [2, 48], strides = [1, 1]} : vector<2x64xf32> to vector<2x48xf32>
    %291 = arith.negf %290 : vector<2x48xf32>
    %292 = math.exp %291 : vector<2x48xf32>
    %cst_73 = arith.constant 1.000000e+00 : f32
    %293 = vector.broadcast %cst_73 : f32 to vector<2x48xf32>
    %294 = arith.addf %293, %292 : vector<2x48xf32>
    %295 = arith.divf %293, %294 : vector<2x48xf32>
    %296 = vector.extract_strided_slice %289 {offsets = [0, 48], sizes = [2, 16], strides = [1, 1]} : vector<2x64xf32> to vector<2x16xf32>
    %297 = math.tanh %296 : vector<2x16xf32>
    %298 = vector.extract_strided_slice %295 {offsets = [0, 0], sizes = [2, 16], strides = [1, 1]} : vector<2x48xf32> to vector<2x16xf32>
    %299 = vector.extract_strided_slice %295 {offsets = [0, 16], sizes = [2, 16], strides = [1, 1]} : vector<2x48xf32> to vector<2x16xf32>
    %300 = vector.extract_strided_slice %295 {offsets = [0, 32], sizes = [2, 16], strides = [1, 1]} : vector<2x48xf32> to vector<2x16xf32>
    %301 = arith.mulf %299, %258 : vector<2x16xf32>
    %302 = arith.mulf %298, %297 : vector<2x16xf32>
    %303 = arith.addf %301, %302 : vector<2x16xf32>
    %304 = math.tanh %303 : vector<2x16xf32>
    %305 = arith.mulf %300, %304 : vector<2x16xf32>
    %c7_i32_74 = arith.constant 7 : i32
    %306 = arith.subi %c7_i32_74, %c6_i32 : i32
    %307 = arith.index_cast %306 : i32 to index
    %c0_75 = arith.constant 0 : index
    %c0_76 = arith.constant 0 : index
    %308 = vector.load %arg8[%307, %c0_75, %c0_76] : memref<8x2x64xf32, #tpu.memory_space<vmem>>, vector<1x2x64xf32>
    %309 = vector.shape_cast %308 : vector<1x2x64xf32> to vector<2x64xf32>
    %cst_77 = arith.constant dense<0.000000e+00> : vector<2x64xf32>
    %310 = tpu.matmul %282, %13, %cst_77 {dimension_numbers = #tpu.dot_dimension_numbers<[1], [0], [0], [1], [0, 0, 1, 1], [], []>} : vector<2x16xf32>, vector<16x64xf32>, vector<2x64xf32> -> vector<2x64xf32>
    %311 = arith.addf %309, %310 : vector<2x64xf32>
    %312 = vector.extract_strided_slice %311 {offsets = [0, 0], sizes = [2, 48], strides = [1, 1]} : vector<2x64xf32> to vector<2x48xf32>
    %313 = arith.negf %312 : vector<2x48xf32>
    %314 = math.exp %313 : vector<2x48xf32>
    %cst_78 = arith.constant 1.000000e+00 : f32
    %315 = vector.broadcast %cst_78 : f32 to vector<2x48xf32>
    %316 = arith.addf %315, %314 : vector<2x48xf32>
    %317 = arith.divf %315, %316 : vector<2x48xf32>
    %318 = vector.extract_strided_slice %311 {offsets = [0, 48], sizes = [2, 16], strides = [1, 1]} : vector<2x64xf32> to vector<2x16xf32>
    %319 = math.tanh %318 : vector<2x16xf32>
    %320 = vector.extract_strided_slice %317 {offsets = [0, 0], sizes = [2, 16], strides = [1, 1]} : vector<2x48xf32> to vector<2x16xf32>
    %321 = vector.extract_strided_slice %317 {offsets = [0, 16], sizes = [2, 16], strides = [1, 1]} : vector<2x48xf32> to vector<2x16xf32>
    %322 = vector.extract_strided_slice %317 {offsets = [0, 32], sizes = [2, 16], strides = [1, 1]} : vector<2x48xf32> to vector<2x16xf32>
    %323 = arith.mulf %321, %280 : vector<2x16xf32>
    %324 = arith.mulf %320, %319 : vector<2x16xf32>
    %325 = arith.addf %323, %324 : vector<2x16xf32>
    %326 = math.tanh %325 : vector<2x16xf32>
    %327 = arith.mulf %322, %326 : vector<2x16xf32>
    %328 = arith.addf %283, %305 : vector<2x16xf32>
    %329 = arith.addf %284, %327 : vector<2x16xf32>
    %c7_i32_79 = arith.constant 7 : i32
    %330 = arith.index_cast %c7_i32_79 : i32 to index
    %c0_80 = arith.constant 0 : index
    %c0_81 = arith.constant 0 : index
    %331 = vector.load %arg7[%330, %c0_80, %c0_81] : memref<8x2x64xf32, #tpu.memory_space<vmem>>, vector<1x2x64xf32>
    %332 = vector.shape_cast %331 : vector<1x2x64xf32> to vector<2x64xf32>
    %cst_82 = arith.constant dense<0.000000e+00> : vector<2x64xf32>
    %333 = tpu.matmul %305, %12, %cst_82 {dimension_numbers = #tpu.dot_dimension_numbers<[1], [0], [0], [1], [0, 0, 1, 1], [], []>} : vector<2x16xf32>, vector<16x64xf32>, vector<2x64xf32> -> vector<2x64xf32>
    %334 = arith.addf %332, %333 : vector<2x64xf32>
    %335 = vector.extract_strided_slice %334 {offsets = [0, 0], sizes = [2, 48], strides = [1, 1]} : vector<2x64xf32> to vector<2x48xf32>
    %336 = arith.negf %335 : vector<2x48xf32>
    %337 = math.exp %336 : vector<2x48xf32>
    %cst_83 = arith.constant 1.000000e+00 : f32
    %338 = vector.broadcast %cst_83 : f32 to vector<2x48xf32>
    %339 = arith.addf %338, %337 : vector<2x48xf32>
    %340 = arith.divf %338, %339 : vector<2x48xf32>
    %341 = vector.extract_strided_slice %334 {offsets = [0, 48], sizes = [2, 16], strides = [1, 1]} : vector<2x64xf32> to vector<2x16xf32>
    %342 = math.tanh %341 : vector<2x16xf32>
    %343 = vector.extract_strided_slice %340 {offsets = [0, 0], sizes = [2, 16], strides = [1, 1]} : vector<2x48xf32> to vector<2x16xf32>
    %344 = vector.extract_strided_slice %340 {offsets = [0, 16], sizes = [2, 16], strides = [1, 1]} : vector<2x48xf32> to vector<2x16xf32>
    %345 = vector.extract_strided_slice %340 {offsets = [0, 32], sizes = [2, 16], strides = [1, 1]} : vector<2x48xf32> to vector<2x16xf32>
    %346 = arith.mulf %344, %303 : vector<2x16xf32>
    %347 = arith.mulf %343, %342 : vector<2x16xf32>
    %348 = arith.addf %346, %347 : vector<2x16xf32>
    %349 = math.tanh %348 : vector<2x16xf32>
    %350 = arith.mulf %345, %349 : vector<2x16xf32>
    %c7_i32_84 = arith.constant 7 : i32
    %351 = arith.subi %c7_i32_84, %c7_i32_79 : i32
    %352 = arith.index_cast %351 : i32 to index
    %c0_85 = arith.constant 0 : index
    %c0_86 = arith.constant 0 : index
    %353 = vector.load %arg8[%352, %c0_85, %c0_86] : memref<8x2x64xf32, #tpu.memory_space<vmem>>, vector<1x2x64xf32>
    %354 = vector.shape_cast %353 : vector<1x2x64xf32> to vector<2x64xf32>
    %cst_87 = arith.constant dense<0.000000e+00> : vector<2x64xf32>
    %355 = tpu.matmul %327, %13, %cst_87 {dimension_numbers = #tpu.dot_dimension_numbers<[1], [0], [0], [1], [0, 0, 1, 1], [], []>} : vector<2x16xf32>, vector<16x64xf32>, vector<2x64xf32> -> vector<2x64xf32>
    %356 = arith.addf %354, %355 : vector<2x64xf32>
    %357 = vector.extract_strided_slice %356 {offsets = [0, 0], sizes = [2, 48], strides = [1, 1]} : vector<2x64xf32> to vector<2x48xf32>
    %358 = arith.negf %357 : vector<2x48xf32>
    %359 = math.exp %358 : vector<2x48xf32>
    %cst_88 = arith.constant 1.000000e+00 : f32
    %360 = vector.broadcast %cst_88 : f32 to vector<2x48xf32>
    %361 = arith.addf %360, %359 : vector<2x48xf32>
    %362 = arith.divf %360, %361 : vector<2x48xf32>
    %363 = vector.extract_strided_slice %356 {offsets = [0, 48], sizes = [2, 16], strides = [1, 1]} : vector<2x64xf32> to vector<2x16xf32>
    %364 = math.tanh %363 : vector<2x16xf32>
    %365 = vector.extract_strided_slice %362 {offsets = [0, 0], sizes = [2, 16], strides = [1, 1]} : vector<2x48xf32> to vector<2x16xf32>
    %366 = vector.extract_strided_slice %362 {offsets = [0, 16], sizes = [2, 16], strides = [1, 1]} : vector<2x48xf32> to vector<2x16xf32>
    %367 = vector.extract_strided_slice %362 {offsets = [0, 32], sizes = [2, 16], strides = [1, 1]} : vector<2x48xf32> to vector<2x16xf32>
    %368 = arith.mulf %366, %325 : vector<2x16xf32>
    %369 = arith.mulf %365, %364 : vector<2x16xf32>
    %370 = arith.addf %368, %369 : vector<2x16xf32>
    %371 = math.tanh %370 : vector<2x16xf32>
    %372 = arith.mulf %367, %371 : vector<2x16xf32>
    %373 = arith.addf %328, %350 : vector<2x16xf32>
    %374 = arith.addf %329, %372 : vector<2x16xf32>
    %c8_i32 = arith.constant 8 : i32
    %375 = tpu.concatenate %373, %374 in 1 : vector<2x16xf32>, vector<2x16xf32> -> vector<2x32xf32>
    %cst_89 = arith.constant 1.250000e-01 : f32
    %376 = vector.broadcast %cst_89 : f32 to vector<2x32xf32>
    %377 = arith.mulf %375, %376 : vector<2x32xf32>
    %c0_90 = arith.constant 0 : index
    %c0_91 = arith.constant 0 : index
    %378 = vector.load %arg6[%c0_90, %c0_91] : memref<2x32xf32, #tpu.memory_space<vmem>>, vector<2x32xf32>
    tpu.vector_store %arg6[%c0_90, %c0_91], %377 {strides = array<i32>} : memref<2x32xf32, #tpu.memory_space<vmem>>, vector<2x32xf32>,
    return
  }
  func.func @transform_0(%arg0: i32) -> (i32, i32, i32) {
    %c0_i32 = arith.constant 0 : i32
    %c0_i32_0 = arith.constant 0 : i32
    %c0_i32_1 = arith.constant 0 : i32
    return %c0_i32, %arg0, %c0_i32_0 : i32, i32, i32
  }
  func.func @transform_1(%arg0: i32) -> (i32, i32) {
    %c0_i32 = arith.constant 0 : i32
    %c0_i32_0 = arith.constant 0 : i32
    %c0_i32_1 = arith.constant 0 : i32
    return %c0_i32, %c0_i32_0 : i32, i32
  }
  func.func @transform_2(%arg0: i32) -> (i32, i32) {
    %c0_i32 = arith.constant 0 : i32
    %c0_i32_0 = arith.constant 0 : i32
    %c0_i32_1 = arith.constant 0 : i32
    return %c0_i32, %c0_i32_0 : i32, i32
  }
  func.func @transform_3(%arg0: i32) -> (i32, i32) {
    %c0_i32 = arith.constant 0 : i32
    %c0_i32_0 = arith.constant 0 : i32
    %c0_i32_1 = arith.constant 0 : i32
    return %c0_i32, %c0_i32_0 : i32, i32
  }
  func.func @transform_4(%arg0: i32) -> (i32, i32) {
    %c0_i32 = arith.constant 0 : i32
    %c0_i32_0 = arith.constant 0 : i32
    %c0_i32_1 = arith.constant 0 : i32
    return %c0_i32, %c0_i32_0 : i32, i32
  }
  func.func @transform_5(%arg0: i32) -> (i32, i32) {
    %c0_i32 = arith.constant 0 : i32
    %c0_i32_0 = arith.constant 0 : i32
    return %arg0, %c0_i32 : i32, i32
  }
}

</mosaic_0001>

<llo_original>
// kernel: tpu_custom_call.1
$region0: #{tpu_custom_call.1}
  #allocation0 [shape = 'u32[]', space=smem, size = 0x4, offset = 0x4, fixed_abs, tag = 'smem constant byte address 0x4 - core index']
  #allocation1 [shape = 'u32[144,128]{1,0:T(1,128)}', space=vmem, size = 0x12000, scoped, tag = 'internal scratch']
  #allocation2 [shape = 'f32[8,2,64]{2,1,0:T(2,128)}', space=vmem, size = 0x2000, scoped, tag = 'scratch operand']
  #allocation3 [shape = 'f32[8,2,64]{2,1,0:T(2,128)}', space=vmem, size = 0x2000, scoped, tag = 'scratch operand']
  %s0 = inlined_call_operand.hbm [shape: f32[8,2,32], index: 0, kind: input, shape index: {}]
  %s1 = inlined_call_operand.hbm [shape: f32[32,128], index: 1, kind: input, shape index: {}]
  %s2 = inlined_call_operand.hbm [shape: f32[16,64], index: 2, kind: input, shape index: {}]
  %s3 = inlined_call_operand.hbm [shape: f32[16,64], index: 3, kind: input, shape index: {}]
  %s4 = inlined_call_operand.vmem [shape: f32[1,128], index: 4, kind: input, shape index: {}]
  %s5 = inlined_call_operand.hbm [shape: f32[2,32], index: 5, kind: output, shape index: {}]
  %s6 = sld [smem:[#allocation0]]
  $region46: #{tpu_custom_call.1} parent=0
    _
  %s8 = ssub.s32 1, %s6
  %s9 = scalar_select 0, %s8, %s6
  $region1: #{tpu_custom_call.1} parent=0
    #allocation4 [shape = 'u8[8192]{0}', space=vmem, size = 0x2000, scoped, tag = 'input window, operand 0, single buffered']
    #allocation5 [shape = 's32[1]{0}', space=sflag, size = 0x4, scoped, tag = 'scoped memory for tpu_custom_call.1']
    #allocation6 [shape = 's32[1]{0}', space=sflag, size = 0x4, scoped, tag = 'scoped memory for tpu_custom_call.1']
    #allocation7 [shape = 'u8[16384]{0}', space=vmem, size = 0x4000, scoped, tag = 'input window, operand 1, single buffered']
    #allocation8 [shape = 's32[1]{0}', space=sflag, size = 0x4, scoped, tag = 'scoped memory for tpu_custom_call.1']
    #allocation9 [shape = 'u8[8192]{0}', space=vmem, size = 0x2000, scoped, tag = 'input window, operand 2, single buffered']
    #allocation10 [shape = 'u8[8192]{0}', space=vmem, size = 0x2000, scoped, tag = 'input window, operand 3, single buffered']
    #allocation11 [shape = 's32[1]{0}', space=sflag, size = 0x4, scoped, tag = 'scoped memory for tpu_custom_call.1']
    #allocation12 [shape = 'u8[1024]{0}', space=vmem, size = 0x400, scoped, tag = 'output window, operand 0, single buffered']
    %10 = vsyncpa [#allocation5], 0
    %11 = vsyncpa [#allocation8], 0
    %12 = vsyncpa [#allocation11], 0
    %13 = vsyncpa [#allocation6], 0
    // Predicated region
    $region2: #{tpu_custom_call.1} parent=1 // pred_check
      _
    $region3: #{tpu_custom_call.1} parent=1 // pred_check_branch
      %15 = sbr.rel (0) target = $region5
    $region4: #{tpu_custom_call.1} parent=1 // pred_region
      %s17 = ssub.s32 256, 256
      %18 = vsyncadd [#allocation5], %s17
      %s19 = sshll.u32 [#allocation4], 4
      %s20 = int_to_ptr.vmem [resolvable:$true] %s19
      %25 = dma.hbm_to_vmem [thread:$0]  %s0, 256, %s20, [#allocation5], 32, 32, 2
    $region5: #{tpu_custom_call.1} parent=1 // pred_fallthru
      _
    // Predicated region
    $region6: #{tpu_custom_call.1} parent=1 // pred_check
      _
    $region7: #{tpu_custom_call.1} parent=1 // pred_check_branch
      %27 = sbr.rel (0) target = $region9
    $region8: #{tpu_custom_call.1} parent=1 // pred_region
      %s29 = ssub.s32 512, 512
      %30 = vsyncadd [#allocation8], %s29
      %s31 = sshll.u32 [#allocation7], 4
      %s32 = int_to_ptr.vmem [resolvable:$true] %s31
      %37 = dma.hbm_to_vmem [thread:$0]  %s1, 512, %s32, [#allocation8], 128, 128, 8
    $region9: #{tpu_custom_call.1} parent=1 // pred_fallthru
      _
    // Predicated region
    $region10: #{tpu_custom_call.1} parent=1 // pred_check
      _
    $region11: #{tpu_custom_call.1} parent=1 // pred_check_branch
      %39 = sbr.rel (0) target = $region13
    $region12: #{tpu_custom_call.1} parent=1 // pred_region
      %s41 = ssub.s32 256, 256
      %42 = vsyncadd [#allocation8], %s41
      %s43 = sshll.u32 [#allocation9], 4
      %s44 = int_to_ptr.vmem [resolvable:$true] %s43
      %49 = dma.hbm_to_vmem [thread:$0]  %s2, 256, %s44, [#allocation8], 128, 128, 8
    $region13: #{tpu_custom_call.1} parent=1 // pred_fallthru
      _
    // Predicated region
    $region14: #{tpu_custom_call.1} parent=1 // pred_check
      _
    $region15: #{tpu_custom_call.1} parent=1 // pred_check_branch
      %51 = sbr.rel (0) target = $region17
    $region16: #{tpu_custom_call.1} parent=1 // pred_region
      %s53 = ssub.s32 256, 256
      %54 = vsyncadd [#allocation11], %s53
      %s55 = sshll.u32 [#allocation10], 4
      %s56 = int_to_ptr.vmem [resolvable:$true] %s55
      %61 = dma.hbm_to_vmem [thread:$0]  %s3, 256, %s56, [#allocation11], 128, 128, 8
    $region17: #{tpu_custom_call.1} parent=1 // pred_fallthru
      _
    // Predicated region
    $region18: #{tpu_custom_call.1} parent=1 // pred_check
      _
    $region19: #{tpu_custom_call.1} parent=1 // pred_check_branch
      %63 = sbr.rel (0) target = $region21
    $region20: #{tpu_custom_call.1} parent=1 // pred_region
      _
    $region21: #{tpu_custom_call.1} parent=1 // pred_fallthru
      _
    // Predicated region
    $region22: #{tpu_custom_call.1} parent=1 // pred_check
      _
    $region23: #{tpu_custom_call.1} parent=1 // pred_check_branch
      %65 = sbr.rel (0) target = $region25
    $region24: #{tpu_custom_call.1} parent=1 // pred_region
      %66 = dma.done [#allocation5], 256
    $region25: #{tpu_custom_call.1} parent=1 // pred_fallthru
      _
    // Predicated region
    $region26: #{tpu_custom_call.1} parent=1 // pred_check
      _
    $region27: #{tpu_custom_call.1} parent=1 // pred_check_branch
      %68 = sbr.rel (0) target = $region29
    $region28: #{tpu_custom_call.1} parent=1 // pred_region
      %69 = dma.done [#allocation8], 512
    $region29: #{tpu_custom_call.1} parent=1 // pred_fallthru
      _
    // Predicated region
    $region30: #{tpu_custom_call.1} parent=1 // pred_check
      _
    $region31: #{tpu_custom_call.1} parent=1 // pred_check_branch
      %71 = sbr.rel (0) target = $region33
    $region32: #{tpu_custom_call.1} parent=1 // pred_region
      %72 = dma.done [#allocation8], 256
    $region33: #{tpu_custom_call.1} parent=1 // pred_fallthru
      _
    // Predicated region
    $region34: #{tpu_custom_call.1} parent=1 // pred_check
      _
    $region35: #{tpu_custom_call.1} parent=1 // pred_check_branch
      %74 = sbr.rel (0) target = $region37
    $region36: #{tpu_custom_call.1} parent=1 // pred_region
      %75 = dma.done [#allocation11], 256
    $region37: #{tpu_custom_call.1} parent=1 // pred_fallthru
      _
    %v76 = vld [vmem:[#allocation4] sm:$0x3]
    %v77 = vld [vmem:[#allocation4 + $0x2] sm:$0x3]
    %v78 = vld [vmem:[#allocation4 + $0x4] sm:$0x3]
    %v79 = vld [vmem:[#allocation4 + $0x6] sm:$0x3]
    %v80 = vld [vmem:[#allocation4 + $0x8] sm:$0x3]
    %v81 = vld [vmem:[#allocation4 + $0xa] sm:$0x3]
    %v82 = vld [vmem:[#allocation4 + $0xc] sm:$0x3]
    %v83 = vld [vmem:[#allocation4 + $0xe] sm:$0x3]
    %v84 = vld [vmem:[#allocation7] sm:$0xff]
    %v85 = vld [vmem:[#allocation7 + $0x8] sm:$0xff]
    %v86 = vld [vmem:[#allocation7 + $0x10] sm:$0xff]
    %v87 = vld [vmem:[#allocation7 + $0x18] sm:$0xff]
    %v88 = vld [vmem:[%s4] sm:$0x1]
    %v90 = vlaneseq
    %v91 = vshrl.u32 %v90, 7
    %v92 = vsub.s32 0, %v91
    %v93 = vrot.slane %v88, %v92
    %v103 = vcombine.low %v76, %v77
    %v104 = vcombine.low %v78, %v79
    %v106 = vunpack.c.l.s4 1983009808
    %v107 = vunpack.c.0.s8 %v106
    %v108 = vlaneseq
    %v109 = vshrl.u32 %v108, 7
    %v110 = vsub.s32 %v107, %v109
    %v111 = vrot.slane %v103, %v110
    %v113 = vunpack.c.l.s4 1983009808
    %v114 = vunpack.c.0.s8 %v113
    %v115 = vlaneseq
    %v116 = vshrl.u32 %v115, 7
    %v117 = vsub.s32 %v114, %v116
    %v118 = vrot.slane %v104, %v117
    %v119 = vcombine.low %v111, %v118
    %v120 = vcombine.low %v80, %v81
    %v121 = vcombine.low %v82, %v83
    %v123 = vunpack.c.l.s4 1983009808
    %v124 = vunpack.c.0.s8 %v123
    %v125 = vlaneseq
    %v126 = vshrl.u32 %v125, 7
    %v127 = vsub.s32 %v124, %v126
    %v128 = vrot.slane %v120, %v127
    %v130 = vunpack.c.l.s4 1983009808
    %v131 = vunpack.c.0.s8 %v130
    %v132 = vlaneseq
    %v133 = vshrl.u32 %v132, 7
    %v134 = vsub.s32 %v131, %v133
    %v135 = vrot.slane %v121, %v134
    %v136 = vcombine.low %v128, %v135
    %vm137 = vcmask 261120
    %v138 = vsel %vm137, %v119, 0
    %v140 = vsel %vm137, %v136, 0
    %142 = vmatprep.subr.mxu0 0.0
    %143 = vmatpush1.msra.mxu0 %v84
    %144 = vmatprep.subr.mxu0 0.0
    %145 = vmatpush1.msra.mxu0 %v85
    %146 = vmatprep.subr.mxu0 0.0
    %147 = vmatpush1.msra.mxu0 %v86
    %148 = vmatprep.subr.mxu0 0.0
    %149 = vmatpush1.msra.mxu0 %v87
    %150 = vmatprep.subr.mxu0 0.0
    %151 = vmatpush1.msra.mxu0 0.0
    %152 = vmatprep.subr.mxu0 0.0
    %153 = vmatpush1.msra.mxu0 0.0
    %154 = vmatprep.subr.mxu0 0.0
    %155 = vmatpush1.msra.mxu0 0.0
    %156 = vmatprep.subr.mxu0 0.0
    %157 = vmatpush1.msra.mxu0 0.0
    %158 = vmatprep.subr.mxu0 0.0
    %159 = vmatpush1.msra.mxu0 0.0
    %160 = vmatprep.subr.mxu0 0.0
    %161 = vmatpush1.msra.mxu0 0.0
    %162 = vmatprep.subr.mxu0 0.0
    %163 = vmatpush1.msra.mxu0 0.0
    %164 = vmatprep.subr.mxu0 0.0
    %165 = vmatpush1.msra.mxu0 0.0
    %166 = vmatprep.subr.mxu0 0.0
    %167 = vmatpush1.msra.mxu0 0.0
    %168 = vmatprep.subr.mxu0 0.0
    %169 = vmatpush1.msra.mxu0 0.0
    %170 = vmatprep.subr.mxu0 0.0
    %171 = vmatpush1.msra.mxu0 0.0
    %172 = vmatprep.subr.mxu0 0.0
    %173 = vmatpush1.msra.mxu0 0.0
    %174 = vmatprep.subr.mxu0 0.0
    %175 = vmatpush1.msra.mxu0 0.0
    %176 = vmatprep.subr.mxu0 0.0
    %177 = vmatpush1.msra.mxu0 0.0
    %178 = vmatprep.subr.mxu0 0.0
    %179 = vmatpush1.msra.mxu0 0.0
    %180 = vmatprep.subr.mxu0 0.0
    %181 = vmatpush1.msra.mxu0 0.0
    %182 = vmatprep.subr.mxu0 0.0
    %183 = vmatpush1.msra.mxu0 0.0
    %184 = vmatprep.subr.mxu0 0.0
    %185 = vmatpush1.msra.mxu0 0.0
    %186 = vmatprep.subr.mxu0 0.0
    %187 = vmatpush1.msra.mxu0 0.0
    %188 = vmatprep.subr.mxu0 0.0
    %189 = vmatpush1.msra.mxu0 0.0
    %190 = vmatprep.subr.mxu0 0.0
    %191 = vmatpush1.msra.mxu0 0.0
    %192 = vmatprep.subr.mxu0 0.0
    %193 = vmatpush1.msra.mxu0 0.0
    %194 = vmatprep.subr.mxu0 0.0
    %195 = vmatpush1.msra.mxu0 0.0
    %196 = vmatprep.subr.mxu0 0.0
    %197 = vmatpush1.msra.mxu0 0.0
    %198 = vmatprep.subr.mxu0 0.0
    %199 = vmatpush1.msra.mxu0 0.0
    %200 = vmatprep.subr.mxu0 0.0
    %201 = vmatpush1.msra.mxu0 0.0
    %202 = vmatprep.subr.mxu0 0.0
    %203 = vmatpush1.msra.mxu0 0.0
    %204 = vmatprep.subr.mxu0 0.0
    %205 = vmatpush1.msra.mxu0 0.0
    %206 = vmatprep.mubr.f32.mxu0 0.0
    %207 = vmatmul.mubr.f32.gmra.mrb[0].mxu0 %v138
    %v208 = vpop.f32.mrb[0].mxu0
    %v209 = vadd.f32 %v93, %v208
    %v210 = vpop.f32.mrb[0].mxu0
    %211 = vmatprep.mubr.f32.mxu0 0.0
    %212 = vmatmul.mubr.f32.gmra.mrb[0].mxu0 %v140
    %v213 = vpop.f32.mrb[0].mxu0
    %v214 = vadd.f32 %v93, %v213
    %v215 = vpop.f32.mrb[0].mxu0
    %216 = vdwg.mxu0
    %v219 = vcombine.high %v209, %v209
    %v221 = vunpack.c.l.s4 1983009808
    %v222 = vunpack.c.0.s8 %v221
    %v223 = vlaneseq
    %v224 = vshrl.u32 %v223, 7
    %v225 = vsub.s32 %v222, %v224
    %v226 = vrot.slane %v209, %v225
    %v228 = vunpack.c.l.s4 1983009808
    %v229 = vunpack.c.0.s8 %v228
    %v230 = vlaneseq
    %v231 = vshrl.u32 %v230, 7
    %v232 = vsub.s32 %v229, %v231
    %v233 = vrot.slane %v219, %v232
    %v234 = vcombine.high %v226, %v226
    %v235 = vcombine.high %v233, %v233
    %v236 = vcombine.high %v214, %v214
    %v238 = vunpack.c.l.s4 1983009808
    %v239 = vunpack.c.0.s8 %v238
    %v240 = vlaneseq
    %v241 = vshrl.u32 %v240, 7
    %v242 = vsub.s32 %v239, %v241
    %v243 = vrot.slane %v214, %v242
    %v245 = vunpack.c.l.s4 1983009808
    %v246 = vunpack.c.0.s8 %v245
    %v247 = vlaneseq
    %v248 = vshrl.u32 %v247, 7
    %v249 = vsub.s32 %v246, %v248
    %v250 = vrot.slane %v236, %v249
    %v251 = vcombine.high %v243, %v243
    %v252 = vcombine.high %v250, %v250
    %vm261 = vcmask 517120
    %262 = vst.msk [vmem:[#allocation2] sm:$0x3] %vm261, %v226
    %263 = vst.msk [vmem:[#allocation2 + $0x2] sm:$0x3] %vm261, %v234
    %264 = vst.msk [vmem:[#allocation2 + $0x4] sm:$0x3] %vm261, %v233
    %265 = vst.msk [vmem:[#allocation2 + $0x6] sm:$0x3] %vm261, %v235
    %266 = vst.msk [vmem:[#allocation2 + $0x8] sm:$0x3] %vm261, %v243
    %267 = vst.msk [vmem:[#allocation2 + $0xa] sm:$0x3] %vm261, %v251
    %268 = vst.msk [vmem:[#allocation2 + $0xc] sm:$0x3] %vm261, %v250
    %269 = vst.msk [vmem:[#allocation2 + $0xe] sm:$0x3] %vm261, %v252
    %v271 = vunpack.c.l.s4 1983009808
    %v272 = vunpack.c.0.s8 %v271
    %v273 = vlaneseq
    %v274 = vshrl.u32 %v273, 7
    %v275 = vsub.s32 %v272, %v274
    %v276 = vrot.slane %v226, %v275
    %v278 = vunpack.c.l.s4 1983009808
    %v279 = vunpack.c.0.s8 %v278
    %v280 = vlaneseq
    %v281 = vshrl.u32 %v280, 7
    %v282 = vsub.s32 %v279, %v281
    %v283 = vrot.slane %v234, %v282
    %v285 = vunpack.c.l.s4 1983009808
    %v286 = vunpack.c.0.s8 %v285
    %v287 = vlaneseq
    %v288 = vshrl.u32 %v287, 7
    %v289 = vsub.s32 %v286, %v288
    %v290 = vrot.slane %v233, %v289
    %v292 = vunpack.c.l.s4 1983009808
    %v293 = vunpack.c.0.s8 %v292
    %v294 = vlaneseq
    %v295 = vshrl.u32 %v294, 7
    %v296 = vsub.s32 %v293, %v295
    %v297 = vrot.slane %v235, %v296
    %v299 = vunpack.c.l.s4 1983009808
    %v300 = vunpack.c.0.s8 %v299
    %v301 = vlaneseq
    %v302 = vshrl.u32 %v301, 7
    %v303 = vsub.s32 %v300, %v302
    %v304 = vrot.slane %v243, %v303
    %v306 = vunpack.c.l.s4 1983009808
    %v307 = vunpack.c.0.s8 %v306
    %v308 = vlaneseq
    %v309 = vshrl.u32 %v308, 7
    %v310 = vsub.s32 %v307, %v309
    %v311 = vrot.slane %v251, %v310
    %v313 = vunpack.c.l.s4 1983009808
    %v314 = vunpack.c.0.s8 %v313
    %v315 = vlaneseq
    %v316 = vshrl.u32 %v315, 7
    %v317 = vsub.s32 %v314, %v316
    %v318 = vrot.slane %v250, %v317
    %v320 = vunpack.c.l.s4 1983009808
    %v321 = vunpack.c.0.s8 %v320
    %v322 = vlaneseq
    %v323 = vshrl.u32 %v322, 7
    %v324 = vsub.s32 %v321, %v323
    %v325 = vrot.slane %v252, %v324
    %326 = vrot.lane.b32.xlu0 %v276, 64
    %v327 = vpop.permute.xlu0 %326
    %328 = vrot.lane.b32.xlu0 %v283, 64
    %v329 = vpop.permute.xlu0 %328
    %330 = vrot.lane.b32.xlu0 %v290, 64
    %v331 = vpop.permute.xlu0 %330
    %332 = vrot.lane.b32.xlu0 %v297, 64
    %v333 = vpop.permute.xlu0 %332
    %334 = vrot.lane.b32.xlu0 %v304, 64
    %v335 = vpop.permute.xlu0 %334
    %336 = vrot.lane.b32.xlu0 %v311, 64
    %v337 = vpop.permute.xlu0 %336
    %338 = vrot.lane.b32.xlu0 %v318, 64
    %v339 = vpop.permute.xlu0 %338
    %340 = vrot.lane.b32.xlu0 %v325, 64
    %v341 = vpop.permute.xlu0 %340
    %350 = vst.msk [vmem:[#allocation3] sm:$0x3] %vm261, %v327
    %351 = vst.msk [vmem:[#allocation3 + $0x2] sm:$0x3] %vm261, %v329
    %352 = vst.msk [vmem:[#allocation3 + $0x4] sm:$0x3] %vm261, %v331
    %353 = vst.msk [vmem:[#allocation3 + $0x6] sm:$0x3] %vm261, %v333
    %354 = vst.msk [vmem:[#allocation3 + $0x8] sm:$0x3] %vm261, %v335
    %355 = vst.msk [vmem:[#allocation3 + $0xa] sm:$0x3] %vm261, %v337
    %356 = vst.msk [vmem:[#allocation3 + $0xc] sm:$0x3] %vm261, %v339
    %357 = vst.msk [vmem:[#allocation3 + $0xe] sm:$0x3] %vm261, %v341
    %v358 = vld [vmem:[#allocation9] sm:$0xff]
    %v359 = vld [vmem:[#allocation9 + $0x8] sm:$0xff]
    %v360 = vld [vmem:[#allocation10] sm:$0xff]
    %v361 = vld [vmem:[#allocation10 + $0x8] sm:$0xff]
    %v362 = vld [vmem:[#allocation2] sm:$0x3]
    %vm363 = vcmask 130048
    %v365 = vsel %vm363, 0.0, 0
    %367 = vmatprep.subr.mxu0 0.0
    %368 = vmatpush1.msra.mxu0 %v358
    %369 = vmatprep.subr.mxu0 0.0
    %370 = vmatpush1.msra.mxu0 %v359
    %371 = vmatprep.subr.mxu0 0.0
    %372 = vmatpush1.msra.mxu0 0.0
    %373 = vmatprep.subr.mxu0 0.0
    %374 = vmatpush1.msra.mxu0 0.0
    %375 = vmatprep.subr.mxu0 0.0
    %376 = vmatpush1.msra.mxu0 0.0
    %377 = vmatprep.subr.mxu0 0.0
    %378 = vmatpush1.msra.mxu0 0.0
    %379 = vmatprep.subr.mxu0 0.0
    %380 = vmatpush1.msra.mxu0 0.0
    %381 = vmatprep.subr.mxu0 0.0
    %382 = vmatpush1.msra.mxu0 0.0
    %383 = vmatprep.subr.mxu0 0.0
    %384 = vmatpush1.msra.mxu0 0.0
    %385 = vmatprep.subr.mxu0 0.0
    %386 = vmatpush1.msra.mxu0 0.0
    %387 = vmatprep.subr.mxu0 0.0
    %388 = vmatpush1.msra.mxu0 0.0
    %389 = vmatprep.subr.mxu0 0.0
    %390 = vmatpush1.msra.mxu0 0.0
    %391 = vmatprep.subr.mxu0 0.0
    %392 = vmatpush1.msra.mxu0 0.0
    %393 = vmatprep.subr.mxu0 0.0
    %394 = vmatpush1.msra.mxu0 0.0
    %395 = vmatprep.subr.mxu0 0.0
    %396 = vmatpush1.msra.mxu0 0.0
    %397 = vmatprep.subr.mxu0 0.0
    %398 = vmatpush1.msra.mxu0 0.0
    %399 = vmatprep.subr.mxu0 0.0
    %400 = vmatpush1.msra.mxu0 0.0
    %401 = vmatprep.subr.mxu0 0.0
    %402 = vmatpush1.msra.mxu0 0.0
    %403 = vmatprep.subr.mxu0 0.0
    %404 = vmatpush1.msra.mxu0 0.0
    %405 = vmatprep.subr.mxu0 0.0
    %406 = vmatpush1.msra.mxu0 0.0
    %407 = vmatprep.subr.mxu0 0.0
    %408 = vmatpush1.msra.mxu0 0.0
    %409 = vmatprep.subr.mxu0 0.0
    %410 = vmatpush1.msra.mxu0 0.0
    %411 = vmatprep.subr.mxu0 0.0
    %412 = vmatpush1.msra.mxu0 0.0
    %413 = vmatprep.subr.mxu0 0.0
    %414 = vmatpush1.msra.mxu0 0.0
    %415 = vmatprep.subr.mxu0 0.0
    %416 = vmatpush1.msra.mxu0 0.0
    %417 = vmatprep.subr.mxu0 0.0
    %418 = vmatpush1.msra.mxu0 0.0
    %419 = vmatprep.subr.mxu0 0.0
    %420 = vmatpush1.msra.mxu0 0.0
    %421 = vmatprep.subr.mxu0 0.0
    %422 = vmatpush1.msra.mxu0 0.0
    %423 = vmatprep.subr.mxu0 0.0
    %424 = vmatpush1.msra.mxu0 0.0
    %425 = vmatprep.subr.mxu0 0.0
    %426 = vmatpush1.msra.mxu0 0.0
    %427 = vmatprep.subr.mxu0 0.0
    %428 = vmatpush1.msra.mxu0 0.0
    %429 = vmatprep.subr.mxu0 0.0
    %430 = vmatpush1.msra.mxu0 0.0
    %431 = vmatprep.mubr.f32.mxu0 0.0
    %432 = vmatmul.mubr.f32.gmra.mrb[0].mxu0 %v365
    %v433 = vpop.f32.mrb[0].mxu0
    %v434 = vadd.f32 0.0, %v433
    %v435 = vpop.f32.mrb[0].mxu0
    %436 = vdwg.mxu0
    %v437 = vadd.f32 %v362, %v434
    %v438 = vxor.u32 %v437, 2147483648
    %v439 = vmul.f32 %v438, 1.442695
    %v440 = vpow.pop %v439
    %v441 = vadd.f32 %v440, 1.0
    %v442 = vrcp.pop %v441
    %v443 = vmul.f32 1.0, %v442
    %v444 = vtanh.pop %v437
    %v445 = vmul.f32 %v443, 0.0
    %447 = vrot.lane.b32.xlu0 %v444, 80
    %v448 = vpop.permute.xlu0 %447
    %v450 = vmul.f32 %v443, %v448
    %452 = vrot.lane.b32.xlu0 %v450, 16
    %v453 = vpop.permute.xlu0 %452
    %v455 = vadd.f32 %v445, %v453
    %v456 = vtanh.pop %v455
    %458 = vrot.lane.b32.xlu0 %v456, 16
    %v459 = vpop.permute.xlu0 %458
    %v461 = vmul.f32 %v443, %v459
    %s462 = scalar_lea.vmem [#allocation3], 14
    %v463 = vld [vmem:[%s462] sm:$0x3]
    %464 = vmatprep.subr.mxu0 0.0
    %465 = vmatpush1.msra.mxu0 %v360
    %466 = vmatprep.subr.mxu0 0.0
    %467 = vmatpush1.msra.mxu0 %v361
    %468 = vmatprep.subr.mxu0 0.0
    %469 = vmatpush1.msra.mxu0 0.0
    %470 = vmatprep.subr.mxu0 0.0
    %471 = vmatpush1.msra.mxu0 0.0
    %472 = vmatprep.subr.mxu0 0.0
    %473 = vmatpush1.msra.mxu0 0.0
    %474 = vmatprep.subr.mxu0 0.0
    %475 = vmatpush1.msra.mxu0 0.0
    %476 = vmatprep.subr.mxu0 0.0
    %477 = vmatpush1.msra.mxu0 0.0
    %478 = vmatprep.subr.mxu0 0.0
    %479 = vmatpush1.msra.mxu0 0.0
    %480 = vmatprep.subr.mxu0 0.0
    %481 = vmatpush1.msra.mxu0 0.0
    %482 = vmatprep.subr.mxu0 0.0
    %483 = vmatpush1.msra.mxu0 0.0
    %484 = vmatprep.subr.mxu0 0.0
    %485 = vmatpush1.msra.mxu0 0.0
    %486 = vmatprep.subr.mxu0 0.0
    %487 = vmatpush1.msra.mxu0 0.0
    %488 = vmatprep.subr.mxu0 0.0
    %489 = vmatpush1.msra.mxu0 0.0
    %490 = vmatprep.subr.mxu0 0.0
    %491 = vmatpush1.msra.mxu0 0.0
    %492 = vmatprep.subr.mxu0 0.0
    %493 = vmatpush1.msra.mxu0 0.0
    %494 = vmatprep.subr.mxu0 0.0
    %495 = vmatpush1.msra.mxu0 0.0
    %496 = vmatprep.subr.mxu0 0.0
    %497 = vmatpush1.msra.mxu0 0.0
    %498 = vmatprep.subr.mxu0 0.0
    %499 = vmatpush1.msra.mxu0 0.0
    %500 = vmatprep.subr.mxu0 0.0
    %501 = vmatpush1.msra.mxu0 0.0
    %502 = vmatprep.subr.mxu0 0.0
    %503 = vmatpush1.msra.mxu0 0.0
    %504 = vmatprep.subr.mxu0 0.0
    %505 = vmatpush1.msra.mxu0 0.0
    %506 = vmatprep.subr.mxu0 0.0
    %507 = vmatpush1.msra.mxu0 0.0
    %508 = vmatprep.subr.mxu0 0.0
    %509 = vmatpush1.msra.mxu0 0.0
    %510 = vmatprep.subr.mxu0 0.0
    %511 = vmatpush1.msra.mxu0 0.0
    %512 = vmatprep.subr.mxu0 0.0
    %513 = vmatpush1.msra.mxu0 0.0
    %514 = vmatprep.subr.mxu0 0.0
    %515 = vmatpush1.msra.mxu0 0.0
    %516 = vmatprep.subr.mxu0 0.0
    %517 = vmatpush1.msra.mxu0 0.0
    %518 = vmatprep.subr.mxu0 0.0
    %519 = vmatpush1.msra.mxu0 0.0
    %520 = vmatprep.subr.mxu0 0.0
    %521 = vmatpush1.msra.mxu0 0.0
    %522 = vmatprep.subr.mxu0 0.0
    %523 = vmatpush1.msra.mxu0 0.0
    %524 = vmatprep.subr.mxu0 0.0
    %525 = vmatpush1.msra.mxu0 0.0
    %526 = vmatprep.subr.mxu0 0.0
    %527 = vmatpush1.msra.mxu0 0.0
    %528 = vmatprep.mubr.f32.mxu0 0.0
    %529 = vmatmul.mubr.f32.gmra.mrb[0].mxu0 %v365
    %v530 = vpop.f32.mrb[0].mxu0
    %v531 = vadd.f32 0.0, %v530
    %v532 = vpop.f32.mrb[0].mxu0
    %533 = vdwg.mxu0
    %v534 = vadd.f32 %v463, %v531
    %v535 = vxor.u32 %v534, 2147483648
    %v536 = vmul.f32 %v535, 1.442695
    %v537 = vpow.pop %v536
    %v538 = vadd.f32 %v537, 1.0
    %v539 = vrcp.pop %v538
    %v540 = vmul.f32 1.0, %v539
    %v541 = vtanh.pop %v534
    %v542 = vmul.f32 %v540, 0.0
    %544 = vrot.lane.b32.xlu0 %v541, 80
    %v545 = vpop.permute.xlu0 %544
    %v547 = vmul.f32 %v540, %v545
    %549 = vrot.lane.b32.xlu0 %v547, 16
    %v550 = vpop.permute.xlu0 %549
    %v552 = vadd.f32 %v542, %v550
    %v553 = vtanh.pop %v552
    %555 = vrot.lane.b32.xlu0 %v553, 16
    %v556 = vpop.permute.xlu0 %555
    %v558 = vmul.f32 %v540, %v556
    %v559 = vadd.f32 %v461, 0.0
    %v560 = vadd.f32 %v558, 0.0
    %s561 = scalar_lea.vmem [#allocation2], 2
    %v562 = vld [vmem:[%s561] sm:$0x3]
    %564 = vrot.lane.b32.xlu0 %v461, 96
    %v565 = vpop.permute.xlu0 %564
    %v566 = vsel %vm363, %v565, 0
    %568 = vmatprep.subr.mxu0 0.0
    %569 = vmatpush1.msra.mxu0 %v358
    %570 = vmatprep.subr.mxu0 0.0
    %571 = vmatpush1.msra.mxu0 %v359
    %572 = vmatprep.subr.mxu0 0.0
    %573 = vmatpush1.msra.mxu0 0.0
    %574 = vmatprep.subr.mxu0 0.0
    %575 = vmatpush1.msra.mxu0 0.0
    %576 = vmatprep.subr.mxu0 0.0
    %577 = vmatpush1.msra.mxu0 0.0
    %578 = vmatprep.subr.mxu0 0.0
    %579 = vmatpush1.msra.mxu0 0.0
    %580 = vmatprep.subr.mxu0 0.0
    %581 = vmatpush1.msra.mxu0 0.0
    %582 = vmatprep.subr.mxu0 0.0
    %583 = vmatpush1.msra.mxu0 0.0
    %584 = vmatprep.subr.mxu0 0.0
    %585 = vmatpush1.msra.mxu0 0.0
    %586 = vmatprep.subr.mxu0 0.0
    %587 = vmatpush1.msra.mxu0 0.0
    %588 = vmatprep.subr.mxu0 0.0
    %589 = vmatpush1.msra.mxu0 0.0
    %590 = vmatprep.subr.mxu0 0.0
    %591 = vmatpush1.msra.mxu0 0.0
    %592 = vmatprep.subr.mxu0 0.0
    %593 = vmatpush1.msra.mxu0 0.0
    %594 = vmatprep.subr.mxu0 0.0
    %595 = vmatpush1.msra.mxu0 0.0
    %596 = vmatprep.subr.mxu0 0.0
    %597 = vmatpush1.msra.mxu0 0.0
    %598 = vmatprep.subr.mxu0 0.0
    %599 = vmatpush1.msra.mxu0 0.0
    %600 = vmatprep.subr.mxu0 0.0
    %601 = vmatpush1.msra.mxu0 0.0
    %602 = vmatprep.subr.mxu0 0.0
    %603 = vmatpush1.msra.mxu0 0.0
    %604 = vmatprep.subr.mxu0 0.0
    %605 = vmatpush1.msra.mxu0 0.0
    %606 = vmatprep.subr.mxu0 0.0
    %607 = vmatpush1.msra.mxu0 0.0
    %608 = vmatprep.subr.mxu0 0.0
    %609 = vmatpush1.msra.mxu0 0.0
    %610 = vmatprep.subr.mxu0 0.0
    %611 = vmatpush1.msra.mxu0 0.0
    %612 = vmatprep.subr.mxu0 0.0
    %613 = vmatpush1.msra.mxu0 0.0
    %614 = vmatprep.subr.mxu0 0.0
    %615 = vmatpush1.msra.mxu0 0.0
    %616 = vmatprep.subr.mxu0 0.0
    %617 = vmatpush1.msra.mxu0 0.0
    %618 = vmatprep.subr.mxu0 0.0
    %619 = vmatpush1.msra.mxu0 0.0
    %620 = vmatprep.subr.mxu0 0.0
    %621 = vmatpush1.msra.mxu0 0.0
    %622 = vmatprep.subr.mxu0 0.0
    %623 = vmatpush1.msra.mxu0 0.0
    %624 = vmatprep.subr.mxu0 0.0
    %625 = vmatpush1.msra.mxu0 0.0
    %626 = vmatprep.subr.mxu0 0.0
    %627 = vmatpush1.msra.mxu0 0.0
    %628 = vmatprep.subr.mxu0 0.0
    %629 = vmatpush1.msra.mxu0 0.0
    %630 = vmatprep.subr.mxu0 0.0
    %631 = vmatpush1.msra.mxu0 0.0
    %632 = vmatprep.mubr.f32.mxu0 0.0
    %633 = vmatmul.mubr.f32.gmra.mrb[0].mxu0 %v566
    %v634 = vpop.f32.mrb[0].mxu0
    %v635 = vadd.f32 0.0, %v634
    %v636 = vpop.f32.mrb[0].mxu0
    %637 = vdwg.mxu0
    %v638 = vadd.f32 %v562, %v635
    %v639 = vxor.u32 %v638, 2147483648
    %v640 = vmul.f32 %v639, 1.442695
    %v641 = vpow.pop %v640
    %v642 = vadd.f32 %v641, 1.0
    %v643 = vrcp.pop %v642
    %v644 = vmul.f32 1.0, %v643
    %v645 = vtanh.pop %v638
    %v646 = vmul.f32 %v644, %v455
    %648 = vrot.lane.b32.xlu0 %v645, 80
    %v649 = vpop.permute.xlu0 %648
    %v651 = vmul.f32 %v644, %v649
    %653 = vrot.lane.b32.xlu0 %v651, 16
    %v654 = vpop.permute.xlu0 %653
    %v656 = vadd.f32 %v646, %v654
    %v657 = vtanh.pop %v656
    %659 = vrot.lane.b32.xlu0 %v657, 16
    %v660 = vpop.permute.xlu0 %659
    %v662 = vmul.f32 %v644, %v660
    %s663 = scalar_lea.vmem [#allocation3], 12
    %v664 = vld [vmem:[%s663] sm:$0x3]
    %666 = vrot.lane.b32.xlu0 %v558, 96
    %v667 = vpop.permute.xlu0 %666
    %v668 = vsel %vm363, %v667, 0
    %670 = vmatprep.subr.mxu0 0.0
    %671 = vmatpush1.msra.mxu0 %v360
    %672 = vmatprep.subr.mxu0 0.0
    %673 = vmatpush1.msra.mxu0 %v361
    %674 = vmatprep.subr.mxu0 0.0
    %675 = vmatpush1.msra.mxu0 0.0
    %676 = vmatprep.subr.mxu0 0.0
    %677 = vmatpush1.msra.mxu0 0.0
    %678 = vmatprep.subr.mxu0 0.0
    %679 = vmatpush1.msra.mxu0 0.0
    %680 = vmatprep.subr.mxu0 0.0
    %681 = vmatpush1.msra.mxu0 0.0
    %682 = vmatprep.subr.mxu0 0.0
    %683 = vmatpush1.msra.mxu0 0.0
    %684 = vmatprep.subr.mxu0 0.0
    %685 = vmatpush1.msra.mxu0 0.0
    %686 = vmatprep.subr.mxu0 0.0
    %687 = vmatpush1.msra.mxu0 0.0
    %688 = vmatprep.subr.mxu0 0.0
    %689 = vmatpush1.msra.mxu0 0.0
    %690 = vmatprep.subr.mxu0 0.0
    %691 = vmatpush1.msra.mxu0 0.0
    %692 = vmatprep.subr.mxu0 0.0
    %693 = vmatpush1.msra.mxu0 0.0
    %694 = vmatprep.subr.mxu0 0.0
    %695 = vmatpush1.msra.mxu0 0.0
    %696 = vmatprep.subr.mxu0 0.0
    %697 = vmatpush1.msra.mxu0 0.0
    %698 = vmatprep.subr.mxu0 0.0
    %699 = vmatpush1.msra.mxu0 0.0
    %700 = vmatprep.subr.mxu0 0.0
    %701 = vmatpush1.msra.mxu0 0.0
    %702 = vmatprep.subr.mxu0 0.0
    %703 = vmatpush1.msra.mxu0 0.0
    %704 = vmatprep.subr.mxu0 0.0
    %705 = vmatpush1.msra.mxu0 0.0
    %706 = vmatprep.subr.mxu0 0.0
    %707 = vmatpush1.msra.mxu0 0.0
    %708 = vmatprep.subr.mxu0 0.0
    %709 = vmatpush1.msra.mxu0 0.0
    %710 = vmatprep.subr.mxu0 0.0
    %711 = vmatpush1.msra.mxu0 0.0
    %712 = vmatprep.subr.mxu0 0.0
    %713 = vmatpush1.msra.mxu0 0.0
    %714 = vmatprep.subr.mxu0 0.0
    %715 = vmatpush1.msra.mxu0 0.0
    %716 = vmatprep.subr.mxu0 0.0
    %717 = vmatpush1.msra.mxu0 0.0
    %718 = vmatprep.subr.mxu0 0.0
    %719 = vmatpush1.msra.mxu0 0.0
    %720 = vmatprep.subr.mxu0 0.0
    %721 = vmatpush1.msra.mxu0 0.0
    %722 = vmatprep.subr.mxu0 0.0
    %723 = vmatpush1.msra.mxu0 0.0
    %724 = vmatprep.subr.mxu0 0.0
    %725 = vmatpush1.msra.mxu0 0.0
    %726 = vmatprep.subr.mxu0 0.0
    %727 = vmatpush1.msra.mxu0 0.0
    %728 = vmatprep.subr.mxu0 0.0
    %729 = vmatpush1.msra.mxu0 0.0
    %730 = vmatprep.subr.mxu0 0.0
    %731 = vmatpush1.msra.mxu0 0.0
    %732 = vmatprep.subr.mxu0 0.0
    %733 = vmatpush1.msra.mxu0 0.0
    %734 = vmatprep.mubr.f32.mxu0 0.0
    %735 = vmatmul.mubr.f32.gmra.mrb[0].mxu0 %v668
    %v736 = vpop.f32.mrb[0].mxu0
    %v737 = vadd.f32 0.0, %v736
    %v738 = vpop.f32.mrb[0].mxu0
    %739 = vdwg.mxu0
    %v740 = vadd.f32 %v664, %v737
    %v741 = vxor.u32 %v740, 2147483648
    %v742 = vmul.f32 %v741, 1.442695
    %v743 = vpow.pop %v742
    %v744 = vadd.f32 %v743, 1.0
    %v745 = vrcp.pop %v744
    %v746 = vmul.f32 1.0, %v745
    %v747 = vtanh.pop %v740
    %v748 = vmul.f32 %v746, %v552
    %750 = vrot.lane.b32.xlu0 %v747, 80
    %v751 = vpop.permute.xlu0 %750
    %v753 = vmul.f32 %v746, %v751
    %755 = vrot.lane.b32.xlu0 %v753, 16
    %v756 = vpop.permute.xlu0 %755
    %v758 = vadd.f32 %v748, %v756
    %v759 = vtanh.pop %v758
    %761 = vrot.lane.b32.xlu0 %v759, 16
    %v762 = vpop.permute.xlu0 %761
    %v764 = vmul.f32 %v746, %v762
    %v765 = vadd.f32 %v559, %v662
    %v766 = vadd.f32 %v560, %v764
    %s767 = scalar_lea.vmem [#allocation2], 4
    %v768 = vld [vmem:[%s767] sm:$0x3]
    %770 = vrot.lane.b32.xlu0 %v662, 96
    %v771 = vpop.permute.xlu0 %770
    %v772 = vsel %vm363, %v771, 0
    %774 = vmatprep.subr.mxu0 0.0
    %775 = vmatpush1.msra.mxu0 %v358
    %776 = vmatprep.subr.mxu0 0.0
    %777 = vmatpush1.msra.mxu0 %v359
    %778 = vmatprep.subr.mxu0 0.0
    %779 = vmatpush1.msra.mxu0 0.0
    %780 = vmatprep.subr.mxu0 0.0
    %781 = vmatpush1.msra.mxu0 0.0
    %782 = vmatprep.subr.mxu0 0.0
    %783 = vmatpush1.msra.mxu0 0.0
    %784 = vmatprep.subr.mxu0 0.0
    %785 = vmatpush1.msra.mxu0 0.0
    %786 = vmatprep.subr.mxu0 0.0
    %787 = vmatpush1.msra.mxu0 0.0
    %788 = vmatprep.subr.mxu0 0.0
    %789 = vmatpush1.msra.mxu0 0.0
    %790 = vmatprep.subr.mxu0 0.0
    %791 = vmatpush1.msra.mxu0 0.0
    %792 = vmatprep.subr.mxu0 0.0
    %793 = vmatpush1.msra.mxu0 0.0
    %794 = vmatprep.subr.mxu0 0.0
    %795 = vmatpush1.msra.mxu0 0.0
    %796 = vmatprep.subr.mxu0 0.0
    %797 = vmatpush1.msra.mxu0 0.0
    %798 = vmatprep.subr.mxu0 0.0
    %799 = vmatpush1.msra.mxu0 0.0
    %800 = vmatprep.subr.mxu0 0.0
    %801 = vmatpush1.msra.mxu0 0.0
    %802 = vmatprep.subr.mxu0 0.0
    %803 = vmatpush1.msra.mxu0 0.0
    %804 = vmatprep.subr.mxu0 0.0
    %805 = vmatpush1.msra.mxu0 0.0
    %806 = vmatprep.subr.mxu0 0.0
    %807 = vmatpush1.msra.mxu0 0.0
    %808 = vmatprep.subr.mxu0 0.0
    %809 = vmatpush1.msra.mxu0 0.0
    %810 = vmatprep.subr.mxu0 0.0
    %811 = vmatpush1.msra.mxu0 0.0
    %812 = vmatprep.subr.mxu0 0.0
    %813 = vmatpush1.msra.mxu0 0.0
    %814 = vmatprep.subr.mxu0 0.0
    %815 = vmatpush1.msra.mxu0 0.0
    %816 = vmatprep.subr.mxu0 0.0
    %817 = vmatpush1.msra.mxu0 0.0
    %818 = vmatprep.subr.mxu0 0.0
    %819 = vmatpush1.msra.mxu0 0.0
    %820 = vmatprep.subr.mxu0 0.0
    %821 = vmatpush1.msra.mxu0 0.0
    %822 = vmatprep.subr.mxu0 0.0
    %823 = vmatpush1.msra.mxu0 0.0
    %824 = vmatprep.subr.mxu0 0.0
    %825 = vmatpush1.msra.mxu0 0.0
    %826 = vmatprep.subr.mxu0 0.0
    %827 = vmatpush1.msra.mxu0 0.0
    %828 = vmatprep.subr.mxu0 0.0
    %829 = vmatpush1.msra.mxu0 0.0
    %830 = vmatprep.subr.mxu0 0.0
    %831 = vmatpush1.msra.mxu0 0.0
    %832 = vmatprep.subr.mxu0 0.0
    %833 = vmatpush1.msra.mxu0 0.0
    %834 = vmatprep.subr.mxu0 0.0
    %835 = vmatpush1.msra.mxu0 0.0
    %836 = vmatprep.subr.mxu0 0.0
    %837 = vmatpush1.msra.mxu0 0.0
    %838 = vmatprep.mubr.f32.mxu0 0.0
    %839 = vmatmul.mubr.f32.gmra.mrb[0].mxu0 %v772
    %v840 = vpop.f32.mrb[0].mxu0
    %v841 = vadd.f32 0.0, %v840
    %v842 = vpop.f32.mrb[0].mxu0
    %843 = vdwg.mxu0
    %v844 = vadd.f32 %v768, %v841
    %v845 = vxor.u32 %v844, 2147483648
    %v846 = vmul.f32 %v845, 1.442695
    %v847 = vpow.pop %v846
    %v848 = vadd.f32 %v847, 1.0
    %v849 = vrcp.pop %v848
    %v850 = vmul.f32 1.0, %v849
    %v851 = vtanh.pop %v844
    %v852 = vmul.f32 %v850, %v656
    %854 = vrot.lane.b32.xlu0 %v851, 80
    %v855 = vpop.permute.xlu0 %854
    %v857 = vmul.f32 %v850, %v855
    %859 = vrot.lane.b32.xlu0 %v857, 16
    %v860 = vpop.permute.xlu0 %859
    %v862 = vadd.f32 %v852, %v860
    %v863 = vtanh.pop %v862
    %865 = vrot.lane.b32.xlu0 %v863, 16
    %v866 = vpop.permute.xlu0 %865
    %v868 = vmul.f32 %v850, %v866
    %s869 = scalar_lea.vmem [#allocation3], 10
    %v870 = vld [vmem:[%s869] sm:$0x3]
    %872 = vrot.lane.b32.xlu0 %v764, 96
    %v873 = vpop.permute.xlu0 %872
    %v874 = vsel %vm363, %v873, 0
    %876 = vmatprep.subr.mxu0 0.0
    %877 = vmatpush1.msra.mxu0 %v360
    %878 = vmatprep.subr.mxu0 0.0
    %879 = vmatpush1.msra.mxu0 %v361
    %880 = vmatprep.subr.mxu0 0.0
    %881 = vmatpush1.msra.mxu0 0.0
    %882 = vmatprep.subr.mxu0 0.0
    %883 = vmatpush1.msra.mxu0 0.0
    %884 = vmatprep.subr.mxu0 0.0
    %885 = vmatpush1.msra.mxu0 0.0
    %886 = vmatprep.subr.mxu0 0.0
    %887 = vmatpush1.msra.mxu0 0.0
    %888 = vmatprep.subr.mxu0 0.0
    %889 = vmatpush1.msra.mxu0 0.0
    %890 = vmatprep.subr.mxu0 0.0
    %891 = vmatpush1.msra.mxu0 0.0
    %892 = vmatprep.subr.mxu0 0.0
    %893 = vmatpush1.msra.mxu0 0.0
    %894 = vmatprep.subr.mxu0 0.0
    %895 = vmatpush1.msra.mxu0 0.0
    %896 = vmatprep.subr.mxu0 0.0
    %897 = vmatpush1.msra.mxu0 0.0
    %898 = vmatprep.subr.mxu0 0.0
    %899 = vmatpush1.msra.mxu0 0.0
    %900 = vmatprep.subr.mxu0 0.0
    %901 = vmatpush1.msra.mxu0 0.0
    %902 = vmatprep.subr.mxu0 0.0
    %903 = vmatpush1.msra.mxu0 0.0
    %904 = vmatprep.subr.mxu0 0.0
    %905 = vmatpush1.msra.mxu0 0.0
    %906 = vmatprep.subr.mxu0 0.0
    %907 = vmatpush1.msra.mxu0 0.0
    %908 = vmatprep.subr.mxu0 0.0
    %909 = vmatpush1.msra.mxu0 0.0
    %910 = vmatprep.subr.mxu0 0.0
    %911 = vmatpush1.msra.mxu0 0.0
    %912 = vmatprep.subr.mxu0 0.0
    %913 = vmatpush1.msra.mxu0 0.0
    %914 = vmatprep.subr.mxu0 0.0
    %915 = vmatpush1.msra.mxu0 0.0
    %916 = vmatprep.subr.mxu0 0.0
    %917 = vmatpush1.msra.mxu0 0.0
    %918 = vmatprep.subr.mxu0 0.0
    %919 = vmatpush1.msra.mxu0 0.0
    %920 = vmatprep.subr.mxu0 0.0
    %921 = vmatpush1.msra.mxu0 0.0
    %922 = vmatprep.subr.mxu0 0.0
    %923 = vmatpush1.msra.mxu0 0.0
    %924 = vmatprep.subr.mxu0 0.0
    %925 = vmatpush1.msra.mxu0 0.0
    %926 = vmatprep.subr.mxu0 0.0
    %927 = vmatpush1.msra.mxu0 0.0
    %928 = vmatprep.subr.mxu0 0.0
    %929 = vmatpush1.msra.mxu0 0.0
    %930 = vmatprep.subr.mxu0 0.0
    %931 = vmatpush1.msra.mxu0 0.0
    %932 = vmatprep.subr.mxu0 0.0
    %933 = vmatpush1.msra.mxu0 0.0
    %934 = vmatprep.subr.mxu0 0.0
    %935 = vmatpush1.msra.mxu0 0.0
    %936 = vmatprep.subr.mxu0 0.0
    %937 = vmatpush1.msra.mxu0 0.0
    %938 = vmatprep.subr.mxu0 0.0
    %939 = vmatpush1.msra.mxu0 0.0
    %940 = vmatprep.mubr.f32.mxu0 0.0
    %941 = vmatmul.mubr.f32.gmra.mrb[0].mxu0 %v874
    %v942 = vpop.f32.mrb[0].mxu0
    %v943 = vadd.f32 0.0, %v942
    %v944 = vpop.f32.mrb[0].mxu0
    %945 = vdwg.mxu0
    %v946 = vadd.f32 %v870, %v943
    %v947 = vxor.u32 %v946, 2147483648
    %v948 = vmul.f32 %v947, 1.442695
    %v949 = vpow.pop %v948
    %v950 = vadd.f32 %v949, 1.0
    %v951 = vrcp.pop %v950
    %v952 = vmul.f32 1.0, %v951
    %v953 = vtanh.pop %v946
    %v954 = vmul.f32 %v952, %v758
    %956 = vrot.lane.b32.xlu0 %v953, 80
    %v957 = vpop.permute.xlu0 %956
    %v959 = vmul.f32 %v952, %v957
    %961 = vrot.lane.b32.xlu0 %v959, 16
    %v962 = vpop.permute.xlu0 %961
    %v964 = vadd.f32 %v954, %v962
    %v965 = vtanh.pop %v964
    %967 = vrot.lane.b32.xlu0 %v965, 16
    %v968 = vpop.permute.xlu0 %967
    %v970 = vmul.f32 %v952, %v968
    %v971 = vadd.f32 %v765, %v868
    %v972 = vadd.f32 %v766, %v970
    %s973 = scalar_lea.vmem [#allocation2], 6
    %v974 = vld [vmem:[%s973] sm:$0x3]
    %976 = vrot.lane.b32.xlu0 %v868, 96
    %v977 = vpop.permute.xlu0 %976
    %v978 = vsel %vm363, %v977, 0
    %980 = vmatprep.subr.mxu0 0.0
    %981 = vmatpush1.msra.mxu0 %v358
    %982 = vmatprep.subr.mxu0 0.0
    %983 = vmatpush1.msra.mxu0 %v359
    %984 = vmatprep.subr.mxu0 0.0
    %985 = vmatpush1.msra.mxu0 0.0
    %986 = vmatprep.subr.mxu0 0.0
    %987 = vmatpush1.msra.mxu0 0.0
    %988 = vmatprep.subr.mxu0 0.0
    %989 = vmatpush1.msra.mxu0 0.0
    %990 = vmatprep.subr.mxu0 0.0
    %991 = vmatpush1.msra.mxu0 0.0
    %992 = vmatprep.subr.mxu0 0.0
    %993 = vmatpush1.msra.mxu0 0.0
    %994 = vmatprep.subr.mxu0 0.0
    %995 = vmatpush1.msra.mxu0 0.0
    %996 = vmatprep.subr.mxu0 0.0
    %997 = vmatpush1.msra.mxu0 0.0
    %998 = vmatprep.subr.mxu0 0.0
    %999 = vmatpush1.msra.mxu0 0.0
    %1000 = vmatprep.subr.mxu0 0.0
    %1001 = vmatpush1.msra.mxu0 0.0
    %1002 = vmatprep.subr.mxu0 0.0
    %1003 = vmatpush1.msra.mxu0 0.0
    %1004 = vmatprep.subr.mxu0 0.0
    %1005 = vmatpush1.msra.mxu0 0.0
    %1006 = vmatprep.subr.mxu0 0.0
    %1007 = vmatpush1.msra.mxu0 0.0
    %1008 = vmatprep.subr.mxu0 0.0
    %1009 = vmatpush1.msra.mxu0 0.0
    %1010 = vmatprep.subr.mxu0 0.0
    %1011 = vmatpush1.msra.mxu0 0.0
    %1012 = vmatprep.subr.mxu0 0.0
    %1013 = vmatpush1.msra.mxu0 0.0
    %1014 = vmatprep.subr.mxu0 0.0
    %1015 = vmatpush1.msra.mxu0 0.0
    %1016 = vmatprep.subr.mxu0 0.0
    %1017 = vmatpush1.msra.mxu0 0.0
    %1018 = vmatprep.subr.mxu0 0.0
    %1019 = vmatpush1.msra.mxu0 0.0
    %1020 = vmatprep.subr.mxu0 0.0
    %1021 = vmatpush1.msra.mxu0 0.0
    %1022 = vmatprep.subr.mxu0 0.0
    %1023 = vmatpush1.msra.mxu0 0.0
    %1024 = vmatprep.subr.mxu0 0.0
    %1025 = vmatpush1.msra.mxu0 0.0
    %1026 = vmatprep.subr.mxu0 0.0
    %1027 = vmatpush1.msra.mxu0 0.0
    %1028 = vmatprep.subr.mxu0 0.0
    %1029 = vmatpush1.msra.mxu0 0.0
    %1030 = vmatprep.subr.mxu0 0.0
    %1031 = vmatpush1.msra.mxu0 0.0
    %1032 = vmatprep.subr.mxu0 0.0
    %1033 = vmatpush1.msra.mxu0 0.0
    %1034 = vmatprep.subr.mxu0 0.0
    %1035 = vmatpush1.msra.mxu0 0.0
    %1036 = vmatprep.subr.mxu0 0.0
    %1037 = vmatpush1.msra.mxu0 0.0
    %1038 = vmatprep.subr.mxu0 0.0
    %1039 = vmatpush1.msra.mxu0 0.0
    %1040 = vmatprep.subr.mxu0 0.0
    %1041 = vmatpush1.msra.mxu0 0.0
    %1042 = vmatprep.subr.mxu0 0.0
    %1043 = vmatpush1.msra.mxu0 0.0
    %1044 = vmatprep.mubr.f32.mxu0 0.0
    %1045 = vmatmul.mubr.f32.gmra.mrb[0].mxu0 %v978
    %v1046 = vpop.f32.mrb[0].mxu0
    %v1047 = vadd.f32 0.0, %v1046
    %v1048 = vpop.f32.mrb[0].mxu0
    %1049 = vdwg.mxu0
    %v1050 = vadd.f32 %v974, %v1047
    %v1051 = vxor.u32 %v1050, 2147483648
    %v1052 = vmul.f32 %v1051, 1.442695
    %v1053 = vpow.pop %v1052
    %v1054 = vadd.f32 %v1053, 1.0
    %v1055 = vrcp.pop %v1054
    %v1056 = vmul.f32 1.0, %v1055
    %v1057 = vtanh.pop %v1050
    %v1058 = vmul.f32 %v1056, %v862
    %1060 = vrot.lane.b32.xlu0 %v1057, 80
    %v1061 = vpop.permute.xlu0 %1060
    %v1063 = vmul.f32 %v1056, %v1061
    %1065 = vrot.lane.b32.xlu0 %v1063, 16
    %v1066 = vpop.permute.xlu0 %1065
    %v1068 = vadd.f32 %v1058, %v1066
    %v1069 = vtanh.pop %v1068
    %1071 = vrot.lane.b32.xlu0 %v1069, 16
    %v1072 = vpop.permute.xlu0 %1071
    %v1074 = vmul.f32 %v1056, %v1072
    %s1075 = scalar_lea.vmem [#allocation3], 8
    %v1076 = vld [vmem:[%s1075] sm:$0x3]
    %1078 = vrot.lane.b32.xlu0 %v970, 96
    %v1079 = vpop.permute.xlu0 %1078
    %v1080 = vsel %vm363, %v1079, 0
    %1082 = vmatprep.subr.mxu0 0.0
    %1083 = vmatpush1.msra.mxu0 %v360
    %1084 = vmatprep.subr.mxu0 0.0
    %1085 = vmatpush1.msra.mxu0 %v361
    %1086 = vmatprep.subr.mxu0 0.0
    %1087 = vmatpush1.msra.mxu0 0.0
    %1088 = vmatprep.subr.mxu0 0.0
    %1089 = vmatpush1.msra.mxu0 0.0
    %1090 = vmatprep.subr.mxu0 0.0
    %1091 = vmatpush1.msra.mxu0 0.0
    %1092 = vmatprep.subr.mxu0 0.0
    %1093 = vmatpush1.msra.mxu0 0.0
    %1094 = vmatprep.subr.mxu0 0.0
    %1095 = vmatpush1.msra.mxu0 0.0
    %1096 = vmatprep.subr.mxu0 0.0
    %1097 = vmatpush1.msra.mxu0 0.0
    %1098 = vmatprep.subr.mxu0 0.0
    %1099 = vmatpush1.msra.mxu0 0.0
    %1100 = vmatprep.subr.mxu0 0.0
    %1101 = vmatpush1.msra.mxu0 0.0
    %1102 = vmatprep.subr.mxu0 0.0
    %1103 = vmatpush1.msra.mxu0 0.0
    %1104 = vmatprep.subr.mxu0 0.0
    %1105 = vmatpush1.msra.mxu0 0.0
    %1106 = vmatprep.subr.mxu0 0.0
    %1107 = vmatpush1.msra.mxu0 0.0
    %1108 = vmatprep.subr.mxu0 0.0
    %1109 = vmatpush1.msra.mxu0 0.0
    %1110 = vmatprep.subr.mxu0 0.0
    %1111 = vmatpush1.msra.mxu0 0.0
    %1112 = vmatprep.subr.mxu0 0.0
    %1113 = vmatpush1.msra.mxu0 0.0
    %1114 = vmatprep.subr.mxu0 0.0
    %1115 = vmatpush1.msra.mxu0 0.0
    %1116 = vmatprep.subr.mxu0 0.0
    %1117 = vmatpush1.msra.mxu0 0.0
    %1118 = vmatprep.subr.mxu0 0.0
    %1119 = vmatpush1.msra.mxu0 0.0
    %1120 = vmatprep.subr.mxu0 0.0
    %1121 = vmatpush1.msra.mxu0 0.0
    %1122 = vmatprep.subr.mxu0 0.0
    %1123 = vmatpush1.msra.mxu0 0.0
    %1124 = vmatprep.subr.mxu0 0.0
    %1125 = vmatpush1.msra.mxu0 0.0
    %1126 = vmatprep.subr.mxu0 0.0
    %1127 = vmatpush1.msra.mxu0 0.0
    %1128 = vmatprep.subr.mxu0 0.0
    %1129 = vmatpush1.msra.mxu0 0.0
    %1130 = vmatprep.subr.mxu0 0.0
    %1131 = vmatpush1.msra.mxu0 0.0
    %1132 = vmatprep.subr.mxu0 0.0
    %1133 = vmatpush1.msra.mxu0 0.0
    %1134 = vmatprep.subr.mxu0 0.0
    %1135 = vmatpush1.msra.mxu0 0.0
    %1136 = vmatprep.subr.mxu0 0.0
    %1137 = vmatpush1.msra.mxu0 0.0
    %1138 = vmatprep.subr.mxu0 0.0
    %1139 = vmatpush1.msra.mxu0 0.0
    %1140 = vmatprep.subr.mxu0 0.0
    %1141 = vmatpush1.msra.mxu0 0.0
    %1142 = vmatprep.subr.mxu0 0.0
    %1143 = vmatpush1.msra.mxu0 0.0
    %1144 = vmatprep.subr.mxu0 0.0
    %1145 = vmatpush1.msra.mxu0 0.0
    %1146 = vmatprep.mubr.f32.mxu0 0.0
    %1147 = vmatmul.mubr.f32.gmra.mrb[0].mxu0 %v1080
    %v1148 = vpop.f32.mrb[0].mxu0
    %v1149 = vadd.f32 0.0, %v1148
    %v1150 = vpop.f32.mrb[0].mxu0
    %1151 = vdwg.mxu0
    %v1152 = vadd.f32 %v1076, %v1149
    %v1153 = vxor.u32 %v1152, 2147483648
    %v1154 = vmul.f32 %v1153, 1.442695
    %v1155 = vpow.pop %v1154
    %v1156 = vadd.f32 %v1155, 1.0
    %v1157 = vrcp.pop %v1156
    %v1158 = vmul.f32 1.0, %v1157
    %v1159 = vtanh.pop %v1152
    %v1160 = vmul.f32 %v1158, %v964
    %1162 = vrot.lane.b32.xlu0 %v1159, 80
    %v1163 = vpop.permute.xlu0 %1162
    %v1165 = vmul.f32 %v1158, %v1163
    %1167 = vrot.lane.b32.xlu0 %v1165, 16
    %v1168 = vpop.permute.xlu0 %1167
    %v1170 = vadd.f32 %v1160, %v1168
    %v1171 = vtanh.pop %v1170
    %1173 = vrot.lane.b32.xlu0 %v1171, 16
    %v1174 = vpop.permute.xlu0 %1173
    %v1176 = vmul.f32 %v1158, %v1174
    %v1177 = vadd.f32 %v971, %v1074
    %v1178 = vadd.f32 %v972, %v1176
    %s1179 = scalar_lea.vmem [#allocation2], 8
    %v1180 = vld [vmem:[%s1179] sm:$0x3]
    %1182 = vrot.lane.b32.xlu0 %v1074, 96
    %v1183 = vpop.permute.xlu0 %1182
    %v1184 = vsel %vm363, %v1183, 0
    %1186 = vmatprep.subr.mxu0 0.0
    %1187 = vmatpush1.msra.mxu0 %v358
    %1188 = vmatprep.subr.mxu0 0.0
    %1189 = vmatpush1.msra.mxu0 %v359
    %1190 = vmatprep.subr.mxu0 0.0
    %1191 = vmatpush1.msra.mxu0 0.0
    %1192 = vmatprep.subr.mxu0 0.0
    %1193 = vmatpush1.msra.mxu0 0.0
    %1194 = vmatprep.subr.mxu0 0.0
    %1195 = vmatpush1.msra.mxu0 0.0
    %1196 = vmatprep.subr.mxu0 0.0
    %1197 = vmatpush1.msra.mxu0 0.0
    %1198 = vmatprep.subr.mxu0 0.0
    %1199 = vmatpush1.msra.mxu0 0.0
    %1200 = vmatprep.subr.mxu0 0.0
    %1201 = vmatpush1.msra.mxu0 0.0
    %1202 = vmatprep.subr.mxu0 0.0
    %1203 = vmatpush1.msra.mxu0 0.0
    %1204 = vmatprep.subr.mxu0 0.0
    %1205 = vmatpush1.msra.mxu0 0.0
    %1206 = vmatprep.subr.mxu0 0.0
    %1207 = vmatpush1.msra.mxu0 0.0
    %1208 = vmatprep.subr.mxu0 0.0
    %1209 = vmatpush1.msra.mxu0 0.0
    %1210 = vmatprep.subr.mxu0 0.0
    %1211 = vmatpush1.msra.mxu0 0.0
    %1212 = vmatprep.subr.mxu0 0.0
    %1213 = vmatpush1.msra.mxu0 0.0
    %1214 = vmatprep.subr.mxu0 0.0
    %1215 = vmatpush1.msra.mxu0 0.0
    %1216 = vmatprep.subr.mxu0 0.0
    %1217 = vmatpush1.msra.mxu0 0.0
    %1218 = vmatprep.subr.mxu0 0.0
    %1219 = vmatpush1.msra.mxu0 0.0
    %1220 = vmatprep.subr.mxu0 0.0
    %1221 = vmatpush1.msra.mxu0 0.0
    %1222 = vmatprep.subr.mxu0 0.0
    %1223 = vmatpush1.msra.mxu0 0.0
    %1224 = vmatprep.subr.mxu0 0.0
    %1225 = vmatpush1.msra.mxu0 0.0
    %1226 = vmatprep.subr.mxu0 0.0
    %1227 = vmatpush1.msra.mxu0 0.0
    %1228 = vmatprep.subr.mxu0 0.0
    %1229 = vmatpush1.msra.mxu0 0.0
    %1230 = vmatprep.subr.mxu0 0.0
    %1231 = vmatpush1.msra.mxu0 0.0
    %1232 = vmatprep.subr.mxu0 0.0
    %1233 = vmatpush1.msra.mxu0 0.0
    %1234 = vmatprep.subr.mxu0 0.0
    %1235 = vmatpush1.msra.mxu0 0.0
    %1236 = vmatprep.subr.mxu0 0.0
    %1237 = vmatpush1.msra.mxu0 0.0
    %1238 = vmatprep.subr.mxu0 0.0
    %1239 = vmatpush1.msra.mxu0 0.0
    %1240 = vmatprep.subr.mxu0 0.0
    %1241 = vmatpush1.msra.mxu0 0.0
    %1242 = vmatprep.subr.mxu0 0.0
    %1243 = vmatpush1.msra.mxu0 0.0
    %1244 = vmatprep.subr.mxu0 0.0
    %1245 = vmatpush1.msra.mxu0 0.0
    %1246 = vmatprep.subr.mxu0 0.0
    %1247 = vmatpush1.msra.mxu0 0.0
    %1248 = vmatprep.subr.mxu0 0.0
    %1249 = vmatpush1.msra.mxu0 0.0
    %1250 = vmatprep.mubr.f32.mxu0 0.0
    %1251 = vmatmul.mubr.f32.gmra.mrb[0].mxu0 %v1184
    %v1252 = vpop.f32.mrb[0].mxu0
    %v1253 = vadd.f32 0.0, %v1252
    %v1254 = vpop.f32.mrb[0].mxu0
    %1255 = vdwg.mxu0
    %v1256 = vadd.f32 %v1180, %v1253
    %v1257 = vxor.u32 %v1256, 2147483648
    %v1258 = vmul.f32 %v1257, 1.442695
    %v1259 = vpow.pop %v1258
    %v1260 = vadd.f32 %v1259, 1.0
    %v1261 = vrcp.pop %v1260
    %v1262 = vmul.f32 1.0, %v1261
    %v1263 = vtanh.pop %v1256
    %v1264 = vmul.f32 %v1262, %v1068
    %1266 = vrot.lane.b32.xlu0 %v1263, 80
    %v1267 = vpop.permute.xlu0 %1266
    %v1269 = vmul.f32 %v1262, %v1267
    %1271 = vrot.lane.b32.xlu0 %v1269, 16
    %v1272 = vpop.permute.xlu0 %1271
    %v1274 = vadd.f32 %v1264, %v1272
    %v1275 = vtanh.pop %v1274
    %1277 = vrot.lane.b32.xlu0 %v1275, 16
    %v1278 = vpop.permute.xlu0 %1277
    %v1280 = vmul.f32 %v1262, %v1278
    %s1281 = scalar_lea.vmem [#allocation3], 6
    %v1282 = vld [vmem:[%s1281] sm:$0x3]
    %1284 = vrot.lane.b32.xlu0 %v1176, 96
    %v1285 = vpop.permute.xlu0 %1284
    %v1286 = vsel %vm363, %v1285, 0
    %1288 = vmatprep.subr.mxu0 0.0
    %1289 = vmatpush1.msra.mxu0 %v360
    %1290 = vmatprep.subr.mxu0 0.0
    %1291 = vmatpush1.msra.mxu0 %v361
    %1292 = vmatprep.subr.mxu0 0.0
    %1293 = vmatpush1.msra.mxu0 0.0
    %1294 = vmatprep.subr.mxu0 0.0
    %1295 = vmatpush1.msra.mxu0 0.0
    %1296 = vmatprep.subr.mxu0 0.0
    %1297 = vmatpush1.msra.mxu0 0.0
    %1298 = vmatprep.subr.mxu0 0.0
    %1299 = vmatpush1.msra.mxu0 0.0
    %1300 = vmatprep.subr.mxu0 0.0
    %1301 = vmatpush1.msra.mxu0 0.0
    %1302 = vmatprep.subr.mxu0 0.0
    %1303 = vmatpush1.msra.mxu0 0.0
    %1304 = vmatprep.subr.mxu0 0.0
    %1305 = vmatpush1.msra.mxu0 0.0
    %1306 = vmatprep.subr.mxu0 0.0
    %1307 = vmatpush1.msra.mxu0 0.0
    %1308 = vmatprep.subr.mxu0 0.0
    %1309 = vmatpush1.msra.mxu0 0.0
    %1310 = vmatprep.subr.mxu0 0.0
    %1311 = vmatpush1.msra.mxu0 0.0
    %1312 = vmatprep.subr.mxu0 0.0
    %1313 = vmatpush1.msra.mxu0 0.0
    %1314 = vmatprep.subr.mxu0 0.0
    %1315 = vmatpush1.msra.mxu0 0.0
    %1316 = vmatprep.subr.mxu0 0.0
    %1317 = vmatpush1.msra.mxu0 0.0
    %1318 = vmatprep.subr.mxu0 0.0
    %1319 = vmatpush1.msra.mxu0 0.0
    %1320 = vmatprep.subr.mxu0 0.0
    %1321 = vmatpush1.msra.mxu0 0.0
    %1322 = vmatprep.subr.mxu0 0.0
    %1323 = vmatpush1.msra.mxu0 0.0
    %1324 = vmatprep.subr.mxu0 0.0
    %1325 = vmatpush1.msra.mxu0 0.0
    %1326 = vmatprep.subr.mxu0 0.0
    %1327 = vmatpush1.msra.mxu0 0.0
    %1328 = vmatprep.subr.mxu0 0.0
    %1329 = vmatpush1.msra.mxu0 0.0
    %1330 = vmatprep.subr.mxu0 0.0
    %1331 = vmatpush1.msra.mxu0 0.0
    %1332 = vmatprep.subr.mxu0 0.0
    %1333 = vmatpush1.msra.mxu0 0.0
    %1334 = vmatprep.subr.mxu0 0.0
    %1335 = vmatpush1.msra.mxu0 0.0
    %1336 = vmatprep.subr.mxu0 0.0
    %1337 = vmatpush1.msra.mxu0 0.0
    %1338 = vmatprep.subr.mxu0 0.0
    %1339 = vmatpush1.msra.mxu0 0.0
    %1340 = vmatprep.subr.mxu0 0.0
    %1341 = vmatpush1.msra.mxu0 0.0
    %1342 = vmatprep.subr.mxu0 0.0
    %1343 = vmatpush1.msra.mxu0 0.0
    %1344 = vmatprep.subr.mxu0 0.0
    %1345 = vmatpush1.msra.mxu0 0.0
    %1346 = vmatprep.subr.mxu0 0.0
    %1347 = vmatpush1.msra.mxu0 0.0
    %1348 = vmatprep.subr.mxu0 0.0
    %1349 = vmatpush1.msra.mxu0 0.0
    %1350 = vmatprep.subr.mxu0 0.0
    %1351 = vmatpush1.msra.mxu0 0.0
    %1352 = vmatprep.mubr.f32.mxu0 0.0
    %1353 = vmatmul.mubr.f32.gmra.mrb[0].mxu0 %v1286
    %v1354 = vpop.f32.mrb[0].mxu0
    %v1355 = vadd.f32 0.0, %v1354
    %v1356 = vpop.f32.mrb[0].mxu0
    %1357 = vdwg.mxu0
    %v1358 = vadd.f32 %v1282, %v1355
    %v1359 = vxor.u32 %v1358, 2147483648
    %v1360 = vmul.f32 %v1359, 1.442695
    %v1361 = vpow.pop %v1360
    %v1362 = vadd.f32 %v1361, 1.0
    %v1363 = vrcp.pop %v1362
    %v1364 = vmul.f32 1.0, %v1363
    %v1365 = vtanh.pop %v1358
    %v1366 = vmul.f32 %v1364, %v1170
    %1368 = vrot.lane.b32.xlu0 %v1365, 80
    %v1369 = vpop.permute.xlu0 %1368
    %v1371 = vmul.f32 %v1364, %v1369
    %1373 = vrot.lane.b32.xlu0 %v1371, 16
    %v1374 = vpop.permute.xlu0 %1373
    %v1376 = vadd.f32 %v1366, %v1374
    %v1377 = vtanh.pop %v1376
    %1379 = vrot.lane.b32.xlu0 %v1377, 16
    %v1380 = vpop.permute.xlu0 %1379
    %v1382 = vmul.f32 %v1364, %v1380
    %v1383 = vadd.f32 %v1177, %v1280
    %v1384 = vadd.f32 %v1178, %v1382
    %s1385 = scalar_lea.vmem [#allocation2], 10
    %v1386 = vld [vmem:[%s1385] sm:$0x3]
    %1388 = vrot.lane.b32.xlu0 %v1280, 96
    %v1389 = vpop.permute.xlu0 %1388
    %v1390 = vsel %vm363, %v1389, 0
    %1392 = vmatprep.subr.mxu0 0.0
    %1393 = vmatpush1.msra.mxu0 %v358
    %1394 = vmatprep.subr.mxu0 0.0
    %1395 = vmatpush1.msra.mxu0 %v359
    %1396 = vmatprep.subr.mxu0 0.0
    %1397 = vmatpush1.msra.mxu0 0.0
    %1398 = vmatprep.subr.mxu0 0.0
    %1399 = vmatpush1.msra.mxu0 0.0
    %1400 = vmatprep.subr.mxu0 0.0
    %1401 = vmatpush1.msra.mxu0 0.0
    %1402 = vmatprep.subr.mxu0 0.0
    %1403 = vmatpush1.msra.mxu0 0.0
    %1404 = vmatprep.subr.mxu0 0.0
    %1405 = vmatpush1.msra.mxu0 0.0
    %1406 = vmatprep.subr.mxu0 0.0
    %1407 = vmatpush1.msra.mxu0 0.0
    %1408 = vmatprep.subr.mxu0 0.0
    %1409 = vmatpush1.msra.mxu0 0.0
    %1410 = vmatprep.subr.mxu0 0.0
    %1411 = vmatpush1.msra.mxu0 0.0
    %1412 = vmatprep.subr.mxu0 0.0
    %1413 = vmatpush1.msra.mxu0 0.0
    %1414 = vmatprep.subr.mxu0 0.0
    %1415 = vmatpush1.msra.mxu0 0.0
    %1416 = vmatprep.subr.mxu0 0.0
    %1417 = vmatpush1.msra.mxu0 0.0
    %1418 = vmatprep.subr.mxu0 0.0
    %1419 = vmatpush1.msra.mxu0 0.0
    %1420 = vmatprep.subr.mxu0 0.0
    %1421 = vmatpush1.msra.mxu0 0.0
    %1422 = vmatprep.subr.mxu0 0.0
    %1423 = vmatpush1.msra.mxu0 0.0
    %1424 = vmatprep.subr.mxu0 0.0
    %1425 = vmatpush1.msra.mxu0 0.0
    %1426 = vmatprep.subr.mxu0 0.0
    %1427 = vmatpush1.msra.mxu0 0.0
    %1428 = vmatprep.subr.mxu0 0.0
    %1429 = vmatpush1.msra.mxu0 0.0
    %1430 = vmatprep.subr.mxu0 0.0
    %1431 = vmatpush1.msra.mxu0 0.0
    %1432 = vmatprep.subr.mxu0 0.0
    %1433 = vmatpush1.msra.mxu0 0.0
    %1434 = vmatprep.subr.mxu0 0.0
    %1435 = vmatpush1.msra.mxu0 0.0
    %1436 = vmatprep.subr.mxu0 0.0
    %1437 = vmatpush1.msra.mxu0 0.0
    %1438 = vmatprep.subr.mxu0 0.0
    %1439 = vmatpush1.msra.mxu0 0.0
    %1440 = vmatprep.subr.mxu0 0.0
    %1441 = vmatpush1.msra.mxu0 0.0
    %1442 = vmatprep.subr.mxu0 0.0
    %1443 = vmatpush1.msra.mxu0 0.0
    %1444 = vmatprep.subr.mxu0 0.0
    %1445 = vmatpush1.msra.mxu0 0.0
    %1446 = vmatprep.subr.mxu0 0.0
    %1447 = vmatpush1.msra.mxu0 0.0
    %1448 = vmatprep.subr.mxu0 0.0
    %1449 = vmatpush1.msra.mxu0 0.0
    %1450 = vmatprep.subr.mxu0 0.0
    %1451 = vmatpush1.msra.mxu0 0.0
    %1452 = vmatprep.subr.mxu0 0.0
    %1453 = vmatpush1.msra.mxu0 0.0
    %1454 = vmatprep.subr.mxu0 0.0
    %1455 = vmatpush1.msra.mxu0 0.0
    %1456 = vmatprep.mubr.f32.mxu0 0.0
    %1457 = vmatmul.mubr.f32.gmra.mrb[0].mxu0 %v1390
    %v1458 = vpop.f32.mrb[0].mxu0
    %v1459 = vadd.f32 0.0, %v1458
    %v1460 = vpop.f32.mrb[0].mxu0
    %1461 = vdwg.mxu0
    %v1462 = vadd.f32 %v1386, %v1459
    %v1463 = vxor.u32 %v1462, 2147483648
    %v1464 = vmul.f32 %v1463, 1.442695
    %v1465 = vpow.pop %v1464
    %v1466 = vadd.f32 %v1465, 1.0
    %v1467 = vrcp.pop %v1466
    %v1468 = vmul.f32 1.0, %v1467
    %v1469 = vtanh.pop %v1462
    %v1470 = vmul.f32 %v1468, %v1274
    %1472 = vrot.lane.b32.xlu0 %v1469, 80
    %v1473 = vpop.permute.xlu0 %1472
    %v1475 = vmul.f32 %v1468, %v1473
    %1477 = vrot.lane.b32.xlu0 %v1475, 16
    %v1478 = vpop.permute.xlu0 %1477
    %v1480 = vadd.f32 %v1470, %v1478
    %v1481 = vtanh.pop %v1480
    %1483 = vrot.lane.b32.xlu0 %v1481, 16
    %v1484 = vpop.permute.xlu0 %1483
    %v1486 = vmul.f32 %v1468, %v1484
    %s1487 = scalar_lea.vmem [#allocation3], 4
    %v1488 = vld [vmem:[%s1487] sm:$0x3]
    %1490 = vrot.lane.b32.xlu0 %v1382, 96
    %v1491 = vpop.permute.xlu0 %1490
    %v1492 = vsel %vm363, %v1491, 0
    %1494 = vmatprep.subr.mxu0 0.0
    %1495 = vmatpush1.msra.mxu0 %v360
    %1496 = vmatprep.subr.mxu0 0.0
    %1497 = vmatpush1.msra.mxu0 %v361
    %1498 = vmatprep.subr.mxu0 0.0
    %1499 = vmatpush1.msra.mxu0 0.0
    %1500 = vmatprep.subr.mxu0 0.0
    %1501 = vmatpush1.msra.mxu0 0.0
    %1502 = vmatprep.subr.mxu0 0.0
    %1503 = vmatpush1.msra.mxu0 0.0
    %1504 = vmatprep.subr.mxu0 0.0
    %1505 = vmatpush1.msra.mxu0 0.0
    %1506 = vmatprep.subr.mxu0 0.0
    %1507 = vmatpush1.msra.mxu0 0.0
    %1508 = vmatprep.subr.mxu0 0.0
    %1509 = vmatpush1.msra.mxu0 0.0
    %1510 = vmatprep.subr.mxu0 0.0
    %1511 = vmatpush1.msra.mxu0 0.0
    %1512 = vmatprep.subr.mxu0 0.0
    %1513 = vmatpush1.msra.mxu0 0.0
    %1514 = vmatprep.subr.mxu0 0.0
    %1515 = vmatpush1.msra.mxu0 0.0
    %1516 = vmatprep.subr.mxu0 0.0
    %1517 = vmatpush1.msra.mxu0 0.0
    %1518 = vmatprep.subr.mxu0 0.0
    %1519 = vmatpush1.msra.mxu0 0.0
    %1520 = vmatprep.subr.mxu0 0.0
    %1521 = vmatpush1.msra.mxu0 0.0
    %1522 = vmatprep.subr.mxu0 0.0
    %1523 = vmatpush1.msra.mxu0 0.0
    %1524 = vmatprep.subr.mxu0 0.0
    %1525 = vmatpush1.msra.mxu0 0.0
    %1526 = vmatprep.subr.mxu0 0.0
    %1527 = vmatpush1.msra.mxu0 0.0
    %1528 = vmatprep.subr.mxu0 0.0
    %1529 = vmatpush1.msra.mxu0 0.0
    %1530 = vmatprep.subr.mxu0 0.0
    %1531 = vmatpush1.msra.mxu0 0.0
    %1532 = vmatprep.subr.mxu0 0.0
    %1533 = vmatpush1.msra.mxu0 0.0
    %1534 = vmatprep.subr.mxu0 0.0
    %1535 = vmatpush1.msra.mxu0 0.0
    %1536 = vmatprep.subr.mxu0 0.0
    %1537 = vmatpush1.msra.mxu0 0.0
    %1538 = vmatprep.subr.mxu0 0.0
    %1539 = vmatpush1.msra.mxu0 0.0
    %1540 = vmatprep.subr.mxu0 0.0
    %1541 = vmatpush1.msra.mxu0 0.0
    %1542 = vmatprep.subr.mxu0 0.0
    %1543 = vmatpush1.msra.mxu0 0.0
    %1544 = vmatprep.subr.mxu0 0.0
    %1545 = vmatpush1.msra.mxu0 0.0
    %1546 = vmatprep.subr.mxu0 0.0
    %1547 = vmatpush1.msra.mxu0 0.0
    %1548 = vmatprep.subr.mxu0 0.0
    %1549 = vmatpush1.msra.mxu0 0.0
    %1550 = vmatprep.subr.mxu0 0.0
    %1551 = vmatpush1.msra.mxu0 0.0
    %1552 = vmatprep.subr.mxu0 0.0
    %1553 = vmatpush1.msra.mxu0 0.0
    %1554 = vmatprep.subr.mxu0 0.0
    %1555 = vmatpush1.msra.mxu0 0.0
    %1556 = vmatprep.subr.mxu0 0.0
    %1557 = vmatpush1.msra.mxu0 0.0
    %1558 = vmatprep.mubr.f32.mxu0 0.0
    %1559 = vmatmul.mubr.f32.gmra.mrb[0].mxu0 %v1492
    %v1560 = vpop.f32.mrb[0].mxu0
    %v1561 = vadd.f32 0.0, %v1560
    %v1562 = vpop.f32.mrb[0].mxu0
    %1563 = vdwg.mxu0
    %v1564 = vadd.f32 %v1488, %v1561
    %v1565 = vxor.u32 %v1564, 2147483648
    %v1566 = vmul.f32 %v1565, 1.442695
    %v1567 = vpow.pop %v1566
    %v1568 = vadd.f32 %v1567, 1.0
    %v1569 = vrcp.pop %v1568
    %v1570 = vmul.f32 1.0, %v1569
    %v1571 = vtanh.pop %v1564
    %v1572 = vmul.f32 %v1570, %v1376
    %1574 = vrot.lane.b32.xlu0 %v1571, 80
    %v1575 = vpop.permute.xlu0 %1574
    %v1577 = vmul.f32 %v1570, %v1575
    %1579 = vrot.lane.b32.xlu0 %v1577, 16
    %v1580 = vpop.permute.xlu0 %1579
    %v1582 = vadd.f32 %v1572, %v1580
    %v1583 = vtanh.pop %v1582
    %1585 = vrot.lane.b32.xlu0 %v1583, 16
    %v1586 = vpop.permute.xlu0 %1585
    %v1588 = vmul.f32 %v1570, %v1586
    %v1589 = vadd.f32 %v1383, %v1486
    %v1590 = vadd.f32 %v1384, %v1588
    %s1591 = scalar_lea.vmem [#allocation2], 12
    %v1592 = vld [vmem:[%s1591] sm:$0x3]
    %1594 = vrot.lane.b32.xlu0 %v1486, 96
    %v1595 = vpop.permute.xlu0 %1594
    %v1596 = vsel %vm363, %v1595, 0
    %1598 = vmatprep.subr.mxu0 0.0
    %1599 = vmatpush1.msra.mxu0 %v358
    %1600 = vmatprep.subr.mxu0 0.0
    %1601 = vmatpush1.msra.mxu0 %v359
    %1602 = vmatprep.subr.mxu0 0.0
    %1603 = vmatpush1.msra.mxu0 0.0
    %1604 = vmatprep.subr.mxu0 0.0
    %1605 = vmatpush1.msra.mxu0 0.0
    %1606 = vmatprep.subr.mxu0 0.0
    %1607 = vmatpush1.msra.mxu0 0.0
    %1608 = vmatprep.subr.mxu0 0.0
    %1609 = vmatpush1.msra.mxu0 0.0
    %1610 = vmatprep.subr.mxu0 0.0
    %1611 = vmatpush1.msra.mxu0 0.0
    %1612 = vmatprep.subr.mxu0 0.0
    %1613 = vmatpush1.msra.mxu0 0.0
    %1614 = vmatprep.subr.mxu0 0.0
    %1615 = vmatpush1.msra.mxu0 0.0
    %1616 = vmatprep.subr.mxu0 0.0
    %1617 = vmatpush1.msra.mxu0 0.0
    %1618 = vmatprep.subr.mxu0 0.0
    %1619 = vmatpush1.msra.mxu0 0.0
    %1620 = vmatprep.subr.mxu0 0.0
    %1621 = vmatpush1.msra.mxu0 0.0
    %1622 = vmatprep.subr.mxu0 0.0
    %1623 = vmatpush1.msra.mxu0 0.0
    %1624 = vmatprep.subr.mxu0 0.0
    %1625 = vmatpush1.msra.mxu0 0.0
    %1626 = vmatprep.subr.mxu0 0.0
    %1627 = vmatpush1.msra.mxu0 0.0
    %1628 = vmatprep.subr.mxu0 0.0
    %1629 = vmatpush1.msra.mxu0 0.0
    %1630 = vmatprep.subr.mxu0 0.0
    %1631 = vmatpush1.msra.mxu0 0.0
    %1632 = vmatprep.subr.mxu0 0.0
    %1633 = vmatpush1.msra.mxu0 0.0
    %1634 = vmatprep.subr.mxu0 0.0
    %1635 = vmatpush1.msra.mxu0 0.0
    %1636 = vmatprep.subr.mxu0 0.0
    %1637 = vmatpush1.msra.mxu0 0.0
    %1638 = vmatprep.subr.mxu0 0.0
    %1639 = vmatpush1.msra.mxu0 0.0
    %1640 = vmatprep.subr.mxu0 0.0
    %1641 = vmatpush1.msra.mxu0 0.0
    %1642 = vmatprep.subr.mxu0 0.0
    %1643 = vmatpush1.msra.mxu0 0.0
    %1644 = vmatprep.subr.mxu0 0.0
    %1645 = vmatpush1.msra.mxu0 0.0
    %1646 = vmatprep.subr.mxu0 0.0
    %1647 = vmatpush1.msra.mxu0 0.0
    %1648 = vmatprep.subr.mxu0 0.0
    %1649 = vmatpush1.msra.mxu0 0.0
    %1650 = vmatprep.subr.mxu0 0.0
    %1651 = vmatpush1.msra.mxu0 0.0
    %1652 = vmatprep.subr.mxu0 0.0
    %1653 = vmatpush1.msra.mxu0 0.0
    %1654 = vmatprep.subr.mxu0 0.0
    %1655 = vmatpush1.msra.mxu0 0.0
    %1656 = vmatprep.subr.mxu0 0.0
    %1657 = vmatpush1.msra.mxu0 0.0
    %1658 = vmatprep.subr.mxu0 0.0
    %1659 = vmatpush1.msra.mxu0 0.0
    %1660 = vmatprep.subr.mxu0 0.0
    %1661 = vmatpush1.msra.mxu0 0.0
    %1662 = vmatprep.mubr.f32.mxu0 0.0
    %1663 = vmatmul.mubr.f32.gmra.mrb[0].mxu0 %v1596
    %v1664 = vpop.f32.mrb[0].mxu0
    %v1665 = vadd.f32 0.0, %v1664
    %v1666 = vpop.f32.mrb[0].mxu0
    %1667 = vdwg.mxu0
    %v1668 = vadd.f32 %v1592, %v1665
    %v1669 = vxor.u32 %v1668, 2147483648
    %v1670 = vmul.f32 %v1669, 1.442695
    %v1671 = vpow.pop %v1670
    %v1672 = vadd.f32 %v1671, 1.0
    %v1673 = vrcp.pop %v1672
    %v1674 = vmul.f32 1.0, %v1673
    %v1675 = vtanh.pop %v1668
    %v1676 = vmul.f32 %v1674, %v1480
    %1678 = vrot.lane.b32.xlu0 %v1675, 80
    %v1679 = vpop.permute.xlu0 %1678
    %v1681 = vmul.f32 %v1674, %v1679
    %1683 = vrot.lane.b32.xlu0 %v1681, 16
    %v1684 = vpop.permute.xlu0 %1683
    %v1686 = vadd.f32 %v1676, %v1684
    %v1687 = vtanh.pop %v1686
    %1689 = vrot.lane.b32.xlu0 %v1687, 16
    %v1690 = vpop.permute.xlu0 %1689
    %v1692 = vmul.f32 %v1674, %v1690
    %s1693 = scalar_lea.vmem [#allocation3], 2
    %v1694 = vld [vmem:[%s1693] sm:$0x3]
    %1696 = vrot.lane.b32.xlu0 %v1588, 96
    %v1697 = vpop.permute.xlu0 %1696
    %v1698 = vsel %vm363, %v1697, 0
    %1700 = vmatprep.subr.mxu0 0.0
    %1701 = vmatpush1.msra.mxu0 %v360
    %1702 = vmatprep.subr.mxu0 0.0
    %1703 = vmatpush1.msra.mxu0 %v361
    %1704 = vmatprep.subr.mxu0 0.0
    %1705 = vmatpush1.msra.mxu0 0.0
    %1706 = vmatprep.subr.mxu0 0.0
    %1707 = vmatpush1.msra.mxu0 0.0
    %1708 = vmatprep.subr.mxu0 0.0
    %1709 = vmatpush1.msra.mxu0 0.0
    %1710 = vmatprep.subr.mxu0 0.0
    %1711 = vmatpush1.msra.mxu0 0.0
    %1712 = vmatprep.subr.mxu0 0.0
    %1713 = vmatpush1.msra.mxu0 0.0
    %1714 = vmatprep.subr.mxu0 0.0
    %1715 = vmatpush1.msra.mxu0 0.0
    %1716 = vmatprep.subr.mxu0 0.0
    %1717 = vmatpush1.msra.mxu0 0.0
    %1718 = vmatprep.subr.mxu0 0.0
    %1719 = vmatpush1.msra.mxu0 0.0
    %1720 = vmatprep.subr.mxu0 0.0
    %1721 = vmatpush1.msra.mxu0 0.0
    %1722 = vmatprep.subr.mxu0 0.0
    %1723 = vmatpush1.msra.mxu0 0.0
    %1724 = vmatprep.subr.mxu0 0.0
    %1725 = vmatpush1.msra.mxu0 0.0
    %1726 = vmatprep.subr.mxu0 0.0
    %1727 = vmatpush1.msra.mxu0 0.0
    %1728 = vmatprep.subr.mxu0 0.0
    %1729 = vmatpush1.msra.mxu0 0.0
    %1730 = vmatprep.subr.mxu0 0.0
    %1731 = vmatpush1.msra.mxu0 0.0
    %1732 = vmatprep.subr.mxu0 0.0
    %1733 = vmatpush1.msra.mxu0 0.0
    %1734 = vmatprep.subr.mxu0 0.0
    %1735 = vmatpush1.msra.mxu0 0.0
    %1736 = vmatprep.subr.mxu0 0.0
    %1737 = vmatpush1.msra.mxu0 0.0
    %1738 = vmatprep.subr.mxu0 0.0
    %1739 = vmatpush1.msra.mxu0 0.0
    %1740 = vmatprep.subr.mxu0 0.0
    %1741 = vmatpush1.msra.mxu0 0.0
    %1742 = vmatprep.subr.mxu0 0.0
    %1743 = vmatpush1.msra.mxu0 0.0
    %1744 = vmatprep.subr.mxu0 0.0
    %1745 = vmatpush1.msra.mxu0 0.0
    %1746 = vmatprep.subr.mxu0 0.0
    %1747 = vmatpush1.msra.mxu0 0.0
    %1748 = vmatprep.subr.mxu0 0.0
    %1749 = vmatpush1.msra.mxu0 0.0
    %1750 = vmatprep.subr.mxu0 0.0
    %1751 = vmatpush1.msra.mxu0 0.0
    %1752 = vmatprep.subr.mxu0 0.0
    %1753 = vmatpush1.msra.mxu0 0.0
    %1754 = vmatprep.subr.mxu0 0.0
    %1755 = vmatpush1.msra.mxu0 0.0
    %1756 = vmatprep.subr.mxu0 0.0
    %1757 = vmatpush1.msra.mxu0 0.0
    %1758 = vmatprep.subr.mxu0 0.0
    %1759 = vmatpush1.msra.mxu0 0.0
    %1760 = vmatprep.subr.mxu0 0.0
    %1761 = vmatpush1.msra.mxu0 0.0
    %1762 = vmatprep.subr.mxu0 0.0
    %1763 = vmatpush1.msra.mxu0 0.0
    %1764 = vmatprep.mubr.f32.mxu0 0.0
    %1765 = vmatmul.mubr.f32.gmra.mrb[0].mxu0 %v1698
    %v1766 = vpop.f32.mrb[0].mxu0
    %v1767 = vadd.f32 0.0, %v1766
    %v1768 = vpop.f32.mrb[0].mxu0
    %1769 = vdwg.mxu0
    %v1770 = vadd.f32 %v1694, %v1767
    %v1771 = vxor.u32 %v1770, 2147483648
    %v1772 = vmul.f32 %v1771, 1.442695
    %v1773 = vpow.pop %v1772
    %v1774 = vadd.f32 %v1773, 1.0
    %v1775 = vrcp.pop %v1774
    %v1776 = vmul.f32 1.0, %v1775
    %v1777 = vtanh.pop %v1770
    %v1778 = vmul.f32 %v1776, %v1582
    %1780 = vrot.lane.b32.xlu0 %v1777, 80
    %v1781 = vpop.permute.xlu0 %1780
    %v1783 = vmul.f32 %v1776, %v1781
    %1785 = vrot.lane.b32.xlu0 %v1783, 16
    %v1786 = vpop.permute.xlu0 %1785
    %v1788 = vadd.f32 %v1778, %v1786
    %v1789 = vtanh.pop %v1788
    %1791 = vrot.lane.b32.xlu0 %v1789, 16
    %v1792 = vpop.permute.xlu0 %1791
    %v1794 = vmul.f32 %v1776, %v1792
    %v1795 = vadd.f32 %v1589, %v1692
    %v1796 = vadd.f32 %v1590, %v1794
    %s1797 = scalar_lea.vmem [#allocation2], 14
    %v1798 = vld [vmem:[%s1797] sm:$0x3]
    %1800 = vrot.lane.b32.xlu0 %v1692, 96
    %v1801 = vpop.permute.xlu0 %1800
    %v1802 = vsel %vm363, %v1801, 0
    %1804 = vmatprep.subr.mxu0 0.0
    %1805 = vmatpush1.msra.mxu0 %v358
    %1806 = vmatprep.subr.mxu0 0.0
    %1807 = vmatpush1.msra.mxu0 %v359
    %1808 = vmatprep.subr.mxu0 0.0
    %1809 = vmatpush1.msra.mxu0 0.0
    %1810 = vmatprep.subr.mxu0 0.0
    %1811 = vmatpush1.msra.mxu0 0.0
    %1812 = vmatprep.subr.mxu0 0.0
    %1813 = vmatpush1.msra.mxu0 0.0
    %1814 = vmatprep.subr.mxu0 0.0
    %1815 = vmatpush1.msra.mxu0 0.0
    %1816 = vmatprep.subr.mxu0 0.0
    %1817 = vmatpush1.msra.mxu0 0.0
    %1818 = vmatprep.subr.mxu0 0.0
    %1819 = vmatpush1.msra.mxu0 0.0
    %1820 = vmatprep.subr.mxu0 0.0
    %1821 = vmatpush1.msra.mxu0 0.0
    %1822 = vmatprep.subr.mxu0 0.0
    %1823 = vmatpush1.msra.mxu0 0.0
    %1824 = vmatprep.subr.mxu0 0.0
    %1825 = vmatpush1.msra.mxu0 0.0
    %1826 = vmatprep.subr.mxu0 0.0
    %1827 = vmatpush1.msra.mxu0 0.0
    %1828 = vmatprep.subr.mxu0 0.0
    %1829 = vmatpush1.msra.mxu0 0.0
    %1830 = vmatprep.subr.mxu0 0.0
    %1831 = vmatpush1.msra.mxu0 0.0
    %1832 = vmatprep.subr.mxu0 0.0
    %1833 = vmatpush1.msra.mxu0 0.0
    %1834 = vmatprep.subr.mxu0 0.0
    %1835 = vmatpush1.msra.mxu0 0.0
    %1836 = vmatprep.subr.mxu0 0.0
    %1837 = vmatpush1.msra.mxu0 0.0
    %1838 = vmatprep.subr.mxu0 0.0
    %1839 = vmatpush1.msra.mxu0 0.0
    %1840 = vmatprep.subr.mxu0 0.0
    %1841 = vmatpush1.msra.mxu0 0.0
    %1842 = vmatprep.subr.mxu0 0.0
    %1843 = vmatpush1.msra.mxu0 0.0
    %1844 = vmatprep.subr.mxu0 0.0
    %1845 = vmatpush1.msra.mxu0 0.0
    %1846 = vmatprep.subr.mxu0 0.0
    %1847 = vmatpush1.msra.mxu0 0.0
    %1848 = vmatprep.subr.mxu0 0.0
    %1849 = vmatpush1.msra.mxu0 0.0
    %1850 = vmatprep.subr.mxu0 0.0
    %1851 = vmatpush1.msra.mxu0 0.0
    %1852 = vmatprep.subr.mxu0 0.0
    %1853 = vmatpush1.msra.mxu0 0.0
    %1854 = vmatprep.subr.mxu0 0.0
    %1855 = vmatpush1.msra.mxu0 0.0
    %1856 = vmatprep.subr.mxu0 0.0
    %1857 = vmatpush1.msra.mxu0 0.0
    %1858 = vmatprep.subr.mxu0 0.0
    %1859 = vmatpush1.msra.mxu0 0.0
    %1860 = vmatprep.subr.mxu0 0.0
    %1861 = vmatpush1.msra.mxu0 0.0
    %1862 = vmatprep.subr.mxu0 0.0
    %1863 = vmatpush1.msra.mxu0 0.0
    %1864 = vmatprep.subr.mxu0 0.0
    %1865 = vmatpush1.msra.mxu0 0.0
    %1866 = vmatprep.subr.mxu0 0.0
    %1867 = vmatpush1.msra.mxu0 0.0
    %1868 = vmatprep.mubr.f32.mxu0 0.0
    %1869 = vmatmul.mubr.f32.gmra.mrb[0].mxu0 %v1802
    %v1870 = vpop.f32.mrb[0].mxu0
    %v1871 = vadd.f32 0.0, %v1870
    %v1872 = vpop.f32.mrb[0].mxu0
    %1873 = vdwg.mxu0
    %v1874 = vadd.f32 %v1798, %v1871
    %v1875 = vxor.u32 %v1874, 2147483648
    %v1876 = vmul.f32 %v1875, 1.442695
    %v1877 = vpow.pop %v1876
    %v1878 = vadd.f32 %v1877, 1.0
    %v1879 = vrcp.pop %v1878
    %v1880 = vmul.f32 1.0, %v1879
    %v1881 = vtanh.pop %v1874
    %v1882 = vmul.f32 %v1880, %v1686
    %1884 = vrot.lane.b32.xlu0 %v1881, 80
    %v1885 = vpop.permute.xlu0 %1884
    %v1887 = vmul.f32 %v1880, %v1885
    %1889 = vrot.lane.b32.xlu0 %v1887, 16
    %v1890 = vpop.permute.xlu0 %1889
    %v1892 = vadd.f32 %v1882, %v1890
    %v1893 = vtanh.pop %v1892
    %1895 = vrot.lane.b32.xlu0 %v1893, 16
    %v1896 = vpop.permute.xlu0 %1895
    %v1898 = vmul.f32 %v1880, %v1896
    %v1899 = vld [vmem:[#allocation3] sm:$0x3]
    %1901 = vrot.lane.b32.xlu0 %v1794, 96
    %v1902 = vpop.permute.xlu0 %1901
    %v1903 = vsel %vm363, %v1902, 0
    %1905 = vmatprep.subr.mxu0 0.0
    %1906 = vmatpush1.msra.mxu0 %v360
    %1907 = vmatprep.subr.mxu0 0.0
    %1908 = vmatpush1.msra.mxu0 %v361
    %1909 = vmatprep.subr.mxu0 0.0
    %1910 = vmatpush1.msra.mxu0 0.0
    %1911 = vmatprep.subr.mxu0 0.0
    %1912 = vmatpush1.msra.mxu0 0.0
    %1913 = vmatprep.subr.mxu0 0.0
    %1914 = vmatpush1.msra.mxu0 0.0
    %1915 = vmatprep.subr.mxu0 0.0
    %1916 = vmatpush1.msra.mxu0 0.0
    %1917 = vmatprep.subr.mxu0 0.0
    %1918 = vmatpush1.msra.mxu0 0.0
    %1919 = vmatprep.subr.mxu0 0.0
    %1920 = vmatpush1.msra.mxu0 0.0
    %1921 = vmatprep.subr.mxu0 0.0
    %1922 = vmatpush1.msra.mxu0 0.0
    %1923 = vmatprep.subr.mxu0 0.0
    %1924 = vmatpush1.msra.mxu0 0.0
    %1925 = vmatprep.subr.mxu0 0.0
    %1926 = vmatpush1.msra.mxu0 0.0
    %1927 = vmatprep.subr.mxu0 0.0
    %1928 = vmatpush1.msra.mxu0 0.0
    %1929 = vmatprep.subr.mxu0 0.0
    %1930 = vmatpush1.msra.mxu0 0.0
    %1931 = vmatprep.subr.mxu0 0.0
    %1932 = vmatpush1.msra.mxu0 0.0
    %1933 = vmatprep.subr.mxu0 0.0
    %1934 = vmatpush1.msra.mxu0 0.0
    %1935 = vmatprep.subr.mxu0 0.0
    %1936 = vmatpush1.msra.mxu0 0.0
    %1937 = vmatprep.subr.mxu0 0.0
    %1938 = vmatpush1.msra.mxu0 0.0
    %1939 = vmatprep.subr.mxu0 0.0
    %1940 = vmatpush1.msra.mxu0 0.0
    %1941 = vmatprep.subr.mxu0 0.0
    %1942 = vmatpush1.msra.mxu0 0.0
    %1943 = vmatprep.subr.mxu0 0.0
    %1944 = vmatpush1.msra.mxu0 0.0
    %1945 = vmatprep.subr.mxu0 0.0
    %1946 = vmatpush1.msra.mxu0 0.0
    %1947 = vmatprep.subr.mxu0 0.0
    %1948 = vmatpush1.msra.mxu0 0.0
    %1949 = vmatprep.subr.mxu0 0.0
    %1950 = vmatpush1.msra.mxu0 0.0
    %1951 = vmatprep.subr.mxu0 0.0
    %1952 = vmatpush1.msra.mxu0 0.0
    %1953 = vmatprep.subr.mxu0 0.0
    %1954 = vmatpush1.msra.mxu0 0.0
    %1955 = vmatprep.subr.mxu0 0.0
    %1956 = vmatpush1.msra.mxu0 0.0
    %1957 = vmatprep.subr.mxu0 0.0
    %1958 = vmatpush1.msra.mxu0 0.0
    %1959 = vmatprep.subr.mxu0 0.0
    %1960 = vmatpush1.msra.mxu0 0.0
    %1961 = vmatprep.subr.mxu0 0.0
    %1962 = vmatpush1.msra.mxu0 0.0
    %1963 = vmatprep.subr.mxu0 0.0
    %1964 = vmatpush1.msra.mxu0 0.0
    %1965 = vmatprep.subr.mxu0 0.0
    %1966 = vmatpush1.msra.mxu0 0.0
    %1967 = vmatprep.subr.mxu0 0.0
    %1968 = vmatpush1.msra.mxu0 0.0
    %1969 = vmatprep.mubr.f32.mxu0 0.0
    %1970 = vmatmul.mubr.f32.gmra.mrb[0].mxu0 %v1903
    %v1971 = vpop.f32.mrb[0].mxu0
    %v1972 = vadd.f32 0.0, %v1971
    %v1973 = vpop.f32.mrb[0].mxu0
    %1974 = vdwg.mxu0
    %v1975 = vadd.f32 %v1899, %v1972
    %v1976 = vxor.u32 %v1975, 2147483648
    %v1977 = vmul.f32 %v1976, 1.442695
    %v1978 = vpow.pop %v1977
    %v1979 = vadd.f32 %v1978, 1.0
    %v1980 = vrcp.pop %v1979
    %v1981 = vmul.f32 1.0, %v1980
    %v1982 = vtanh.pop %v1975
    %v1983 = vmul.f32 %v1981, %v1788
    %1985 = vrot.lane.b32.xlu0 %v1982, 80
    %v1986 = vpop.permute.xlu0 %1985
    %v1988 = vmul.f32 %v1981, %v1986
    %1990 = vrot.lane.b32.xlu0 %v1988, 16
    %v1991 = vpop.permute.xlu0 %1990
    %v1993 = vadd.f32 %v1983, %v1991
    %v1994 = vtanh.pop %v1993
    %1996 = vrot.lane.b32.xlu0 %v1994, 16
    %v1997 = vpop.permute.xlu0 %1996
    %v1999 = vmul.f32 %v1981, %v1997
    %v2000 = vadd.f32 %v1795, %v1898
    %v2001 = vadd.f32 %v1796, %v1999
    %2003 = vrot.lane.b32.xlu0 %v2000, 96
    %v2004 = vpop.permute.xlu0 %2003
    %2007 = vrot.lane.b32.xlu0 %v2001, 112
    %v2008 = vpop.permute.xlu0 %2007
    %v2010 = vsel %vm363, %v2004, %v2008
    %v2011 = vmul.f32 %v2010, 0.125
    %vm2012 = vcmask 254976
    %2013 = vst.msk [vmem:[#allocation12] sm:$0x3] %vm2012, %v2011
    // Predicated region
    $region38: #{tpu_custom_call.1} parent=1 // pred_check
      _
    $region39: #{tpu_custom_call.1} parent=1 // pred_check_branch
      %2015 = sbr.rel (0) target = $region41
    $region40: #{tpu_custom_call.1} parent=1 // pred_region
      %s2017 = ssub.s32 32, 32
      %2018 = vsyncadd [#allocation6], %s2017
      %s2020 = sshll.u32 [#allocation12], 4
      %s2021 = int_to_ptr.vmem [resolvable:$true] %s2020
      %2023 = dma.vmem_to_hbm [thread:$0]  %s2021, 32, %s5, [#allocation6]
    $region41: #{tpu_custom_call.1} parent=1 // pred_fallthru
      _
    // Predicated region
    $region42: #{tpu_custom_call.1} parent=1 // pred_check
      _
    $region43: #{tpu_custom_call.1} parent=1 // pred_check_branch
      %2025 = sbr.rel (0) target = $region45
    $region44: #{tpu_custom_call.1} parent=1 // pred_region
      %2026 = dma.done [#allocation6], 32
    $region45: #{tpu_custom_call.1} parent=1 // pred_fallthru
      _
    %2027 = vsyncpa [#allocation5], 1
    %2028 = vsyncpa [#allocation8], 1
    %2029 = vsyncpa [#allocation11], 1
    %2030 = vsyncpa [#allocation6], 1

</llo_original>
